<compile_context>
chip_gen: v7x
topology: tpu7x:2x2x1
jax: 0.10.0
libtpu: 0.0.40
codegen_flags: <defaults>
</compile_context>

<pallas_src>
import functools

import jax
import jax.numpy as jnp
from jax import lax
from jax.experimental import pallas as pl
from jax.experimental.pallas import tpu as pltpu


# ---------------------------------------------------------------------------
# Tile-size helpers
# ---------------------------------------------------------------------------
def _pick_tile(dim, candidates):
    """Largest candidate that evenly divides `dim`, else the full dimension
    (a full-extent block is always a legal BlockSpec)."""
    for c in candidates:
        if dim % c == 0:
            return c
    return dim


def _vmem_limit(*block_bytes):
    """Explicit scoped-VMEM budget: double-buffered blocks + margin, clamped
    so it is valid on v7x (64 MiB physical) as well as v5e/v6e (128 MiB)."""
    need = 2 * sum(block_bytes)
    return int(min(max(2 * need, 16 * 1024 * 1024), 48 * 1024 * 1024))


def _epilogue(y, b_ref, *, add_bias, apply_bn, apply_relu):
    """Fused bias + (training-mode) BatchNorm1d + ReLU on an f32 tile."""
    if add_bias:
        y = y + b_ref[...].astype(jnp.float32)
    if apply_bn:
        # Batch statistics, biased variance, gamma=1, beta=0, eps=1e-5.
        mean = jnp.mean(y, axis=0, keepdims=True)
        var = jnp.mean((y - mean) ** 2, axis=0, keepdims=True)
        y = (y - mean) * lax.rsqrt(var + 1e-5)
    if apply_relu:
        y = jnp.maximum(y, 0.0)
    return y


# ---------------------------------------------------------------------------
# Matmul kernels:  y = relu?(bn?(x @ w [+ b]))
# ---------------------------------------------------------------------------
def _matmul_kernel_acc(*refs, add_bias, apply_bn, apply_relu):
    """K-tiled variant: grid = (B//tb, N//tn, K//tk), f32 VMEM accumulator."""
    if add_bias:
        x_ref, w_ref, b_ref, o_ref, acc_ref = refs
    else:
        x_ref, w_ref, o_ref, acc_ref = refs
        b_ref = None

    @pl.when(pl.program_id(2) == 0)
    def _():
        acc_ref[...] = jnp.zeros_like(acc_ref)

    acc_ref[...] += jnp.dot(
        x_ref[...], w_ref[...], preferred_element_type=jnp.float32
    )

    @pl.when(pl.program_id(2) == pl.num_programs(2) - 1)
    def _():
        y = _epilogue(acc_ref[...], b_ref, add_bias=add_bias,
                      apply_bn=apply_bn, apply_relu=apply_relu)
        o_ref[...] = y.astype(o_ref.dtype)


def _matmul_kernel_direct(*refs, add_bias, apply_bn, apply_relu):
    """Single-K-tile variant: grid = (B//tb, N//tn), no scratch accumulator."""
    if add_bias:
        x_ref, w_ref, b_ref, o_ref = refs
    else:
        x_ref, w_ref, o_ref = refs
        b_ref = None
    y = jnp.dot(x_ref[...], w_ref[...], preferred_element_type=jnp.float32)
    y = _epilogue(y, b_ref, add_bias=add_bias,
                  apply_bn=apply_bn, apply_relu=apply_relu)
    o_ref[...] = y.astype(o_ref.dtype)


# ---------------------------------------------------------------------------
# Standalone BatchNorm1d (+ ReLU) kernel, tiled over features only.  Used when
# the batch axis of the matmul was tiled, so stats could not be fused there.
# ---------------------------------------------------------------------------
def _bn_relu_kernel(y_ref, o_ref, *, apply_relu):
    y = y_ref[...].astype(jnp.float32)
    mean = jnp.mean(y, axis=0, keepdims=True)
    var = jnp.mean((y - mean) ** 2, axis=0, keepdims=True)  # biased variance
    y = (y - mean) * lax.rsqrt(var + 1e-5)
    if apply_relu:
        y = jnp.maximum(y, 0.0)
    o_ref[...] = y.astype(o_ref.dtype)


def bn_relu(y, *, apply_relu=True):
    B, N = y.shape
    tn = _pick_tile(N, (512, 256, 128))
    blk = B * tn * 4
    return pl.pallas_call(
        functools.partial(_bn_relu_kernel, apply_relu=apply_relu),
        out_shape=jax.ShapeDtypeStruct((B, N), y.dtype),
        grid_spec=pltpu.PrefetchScalarGridSpec(
            num_scalar_prefetch=0,
            grid=(N // tn,),
            in_specs=[pl.BlockSpec((B, tn), lambda j: (0, j))],
            out_specs=pl.BlockSpec((B, tn), lambda j: (0, j)),
        ),
        compiler_params=pltpu.CompilerParams(
            dimension_semantics=("parallel",),
            vmem_limit_bytes=_vmem_limit(blk, blk),
        ),
    )(y)


# ---------------------------------------------------------------------------
# Fused Linear (+ BN + ReLU) wrapper
# ---------------------------------------------------------------------------
def fused_linear(x, w, b=None, *, bn=False, relu=False, tb=None, tn=None, tk=None):
    """y = relu?(bn?(x @ w [+ b])).  x: [B, K], w: [K, N], b: [1, N]."""
    B, K = x.shape
    Kw, N = w.shape
    assert K == Kw

    tb = tb or _pick_tile(B, (256, 128, 64, 32, 16, 8))
    tn = tn or _pick_tile(N, (1024, 512, 256, 128))
    tk = tk or _pick_tile(K, (1024, 512, 256, 128))
    assert B % tb == 0 and N % tn == 0 and K % tk == 0

    add_bias = (not bn) and (b is not None)  # bias is cancelled by batch-stat BN
    fuse_bn = bn and (tb == B)               # full batch visible -> fuse BN here
    relu_in_matmul = relu and (fuse_bn or not bn)
    single_k = (K == tk)

    in_specs_3d = [
        pl.BlockSpec((tb, tk), lambda i, j, k: (i, k)),   # activation tile
        pl.BlockSpec((tk, tn), lambda i, j, k: (k, j)),   # weight tile
    ]
    in_specs_2d = [
        pl.BlockSpec((tb, tk), lambda i, j: (i, 0)),
        pl.BlockSpec((tk, tn), lambda i, j: (0, j)),
    ]
    operands = [x, w]
    if add_bias:
        in_specs_3d.append(pl.BlockSpec((1, tn), lambda i, j, k: (0, j)))
        in_specs_2d.append(pl.BlockSpec((1, tn), lambda i, j: (0, j)))
        operands.append(b)

    vmem = _vmem_limit(tb * tk * 4, tk * tn * 4, tn * 4, tb * tn * 4, tb * tn * 4)

    if single_k:
        kernel = functools.partial(
            _matmul_kernel_direct,
            add_bias=add_bias, apply_bn=fuse_bn, apply_relu=relu_in_matmul,
        )
        grid_spec = pltpu.PrefetchScalarGridSpec(
            num_scalar_prefetch=0,
            grid=(B // tb, N // tn),
            in_specs=in_specs_2d,
            out_specs=pl.BlockSpec((tb, tn), lambda i, j: (i, j)),
        )
        semantics = ("parallel", "parallel")
    else:
        kernel = functools.partial(
            _matmul_kernel_acc,
            add_bias=add_bias, apply_bn=fuse_bn, apply_relu=relu_in_matmul,
        )
        grid_spec = pltpu.PrefetchScalarGridSpec(
            num_scalar_prefetch=0,
            grid=(B // tb, N // tn, K // tk),
            in_specs=in_specs_3d,
            out_specs=pl.BlockSpec((tb, tn), lambda i, j, k: (i, j)),
            scratch_shapes=[pltpu.VMEM((tb, tn), jnp.float32)],
        )
        semantics = ("parallel", "parallel", "arbitrary")

    out = pl.pallas_call(
        kernel,
        out_shape=jax.ShapeDtypeStruct((B, N), x.dtype),
        grid_spec=grid_spec,
        compiler_params=pltpu.CompilerParams(
            dimension_semantics=semantics,
            vmem_limit_bytes=vmem,
        ),
    )(*operands)

    if bn and not fuse_bn:
        # Batch was tiled: compute BN stats over the full batch in a second,
        # feature-tiled pass (one extra read+write of the [B, N] activation).
        out = bn_relu(out, apply_relu=relu)
    return out


# ---------------------------------------------------------------------------
# Deterministic PyTorch-style parameter init (like nn.Linear defaults)
# ---------------------------------------------------------------------------
def _init_linear_params(key, in_features, out_features):
    kw, kb = jax.random.split(key)
    bound = 1.0 / jnp.sqrt(jnp.float32(in_features))
    # Stored as [in_features, out_features] (transposed vs. torch's [out, in]).
    w = jax.random.uniform(kw, (in_features, out_features), jnp.float32, -bound, bound)
    b = jax.random.uniform(kb, (1, out_features), jnp.float32, -bound, bound)
    return w, b


# ---------------------------------------------------------------------------
# ProjLayer (Flatten + projection head) built on the Pallas kernels
# ---------------------------------------------------------------------------
class ProjLayerPallas:
    def __init__(self, proj_type, in_features, key):
        self.proj_type = proj_type
        self.params = []
        if proj_type == "i":
            pass  # Identity: no parameters
        elif proj_type == "l":
            self.params.append(_init_linear_params(key, in_features, 1024))
        elif proj_type == "mlp":
            k1, k2 = jax.random.split(key)
            self.params.append(_init_linear_params(k1, in_features, 512))
            self.params.append(_init_linear_params(k2, 512, 1024))
        elif proj_type == "DeInfo":
            k1, k2, k3 = jax.random.split(key, 3)
            self.params.append(_init_linear_params(k1, in_features, 2048))
            self.params.append(_init_linear_params(k2, 2048, 2048))
            self.params.append(_init_linear_params(k3, 2048, 2048))
        else:
            raise ValueError(f"Unknown projector type: {proj_type}")

    def __call__(self, x):
        B = x.shape[0]
        xf = jnp.reshape(x, (B, -1))  # nn.Flatten() on NCHW input

        if self.proj_type == "i":
            return xf
        elif self.proj_type == "l":
            (w, b), = self.params
            return fused_linear(xf, w, b)
        elif self.proj_type == "mlp":
            (w1, b1), (w2, b2) = self.params
            h = fused_linear(xf, w1, b1, relu=True)
            return fused_linear(h, w2, b2)
        else:  # DeInfo
            (w1, b1), (w2, b2), (w3, b3) = self.params
            h = fused_linear(xf, w1, b1, bn=True, relu=True)
            h = fused_linear(h, w2, b2, bn=True, relu=True)
            return fused_linear(h, w3, b3)


# ---------------------------------------------------------------------------
# Pure-JAX reference (PyTorch semantics, incl. bias before BN) for checking
# ---------------------------------------------------------------------------
def _reference(proj, x):
    B = x.shape[0]
    h = jnp.reshape(x, (B, -1)).astype(jnp.float32)
    if proj.proj_type == "i":
        return h
    n_layers = len(proj.params)
    for i, (w, b) in enumerate(proj.params):
        h = h @ w + b
        is_last = i == n_layers - 1
        if proj.proj_type == "DeInfo" and not is_last:
            mean = jnp.mean(h, axis=0, keepdims=True)
            var = jnp.mean((h - mean) ** 2, axis=0, keepdims=True)
            h = (h - mean) * lax.rsqrt(var + 1e-5)
            h = jnp.maximum(h, 0.0)
        elif proj.proj_type == "mlp" and not is_last:
            h = jnp.maximum(h, 0.0)
    return h


if __name__ == "__main__":
    key = jax.random.PRNGKey(0)
    kx, kp, kx2, kp2 = jax.random.split(key, 4)

    # Small NCHW input consistent with Flatten -> LazyLinear: [B, C, H, W]
    B, C, H, W = 2, 4, 16, 16
    x = jax.random.normal(kx, (B, C, H, W), jnp.float32)
    in_features = C * H * W  # 1024

    expected_out = {"i": in_features, "l": 1024, "mlp": 1024, "DeInfo": 2048}

    for proj_type in ["i", "l", "mlp", "DeInfo"]:
        proj = ProjLayerPallas(proj_type, in_features, kp)
        out = jax.block_until_ready(proj(x))
        assert out.shape == (B, expected_out[proj_type]), (proj_type, out.shape)
        ref = _reference(proj, x)
        assert jnp.allclose(out, ref, atol=1e-3, rtol=1e-3), proj_type

    # Exercise the batch-tiled matmul + standalone BN kernel path (tb < B),
    # which real SSL batch sizes would take.
    xb = jax.random.normal(kx2, (16, in_features), jnp.float32)
    wb, bb = _init_linear_params(kp2, in_features, 2048)
    got = jax.block_until_ready(fused_linear(xb, wb, bb, bn=True, relu=True, tb=8))
    y = xb @ wb + bb
    m = jnp.mean(y, axis=0, keepdims=True)
    v = jnp.mean((y - m) ** 2, axis=0, keepdims=True)
    ref = jnp.maximum((y - m) * lax.rsqrt(v + 1e-5), 0.0)
    assert got.shape == (16, 2048)
    assert jnp.allclose(got, ref, atol=1e-3, rtol=1e-3)

    # Exercise the K-tiled accumulator kernel explicitly (tk < K).
    got2 = jax.block_until_ready(fused_linear(xb, wb, bb, tk=256, tn=512))
    ref2 = xb @ wb + bb
    assert jnp.allclose(got2, ref2, atol=1e-3, rtol=1e-3)

    print("KERNEL_OK")
</pallas_src>

<mosaic_0001>
module attributes {stable_mosaic.version = 11 : i64} {
  func.func @_matmul_kernel_direct(%arg0: i32, %arg1: i32, %arg2: memref<2x1024xf32, #tpu.memory_space<vmem>>, %arg3: memref<1024x1024xf32, #tpu.memory_space<vmem>>, %arg4: memref<1x1024xf32, #tpu.memory_space<vmem>>, %arg5: memref<2x1024xf32, #tpu.memory_space<vmem>>) attributes {dimension_semantics = [#tpu.dimension_semantics<parallel>, #tpu.dimension_semantics<parallel>], iteration_bounds = array<i64: 1, 1>, scalar_prefetch = 0 : i64, scratch_operands = 0 : i64, tpu.core_type = #tpu.core_type<tc>, window_params = [{transform_indices = @transform_0, window_bounds = array<i64: 2, 1024>}, {transform_indices = @transform_1, window_bounds = array<i64: 1024, 1024>}, {transform_indices = @transform_2, window_bounds = array<i64: 1, 1024>}, {transform_indices = @transform_3, window_bounds = array<i64: 2, 1024>}]} {
    %c0 = arith.constant 0 : index
    %c0_0 = arith.constant 0 : index
    %0 = vector.load %arg2[%c0, %c0_0] : memref<2x1024xf32, #tpu.memory_space<vmem>>, vector<2x1024xf32>
    %c0_1 = arith.constant 0 : index
    %c0_2 = arith.constant 0 : index
    %1 = vector.load %arg3[%c0_1, %c0_2] : memref<1024x1024xf32, #tpu.memory_space<vmem>>, vector<1024x1024xf32>
    %cst = arith.constant dense<0.000000e+00> : vector<2x1024xf32>
    %2 = tpu.matmul %0, %1, %cst {dimension_numbers = #tpu.dot_dimension_numbers<[1], [0], [0], [1], [0, 0, 1, 1], [], []>} : vector<2x1024xf32>, vector<1024x1024xf32>, vector<2x1024xf32> -> vector<2x1024xf32>
    %c0_3 = arith.constant 0 : index
    %c0_4 = arith.constant 0 : index
    %3 = vector.load %arg4[%c0_3, %c0_4] : memref<1x1024xf32, #tpu.memory_space<vmem>>, vector<1x1024xf32>
    %4 = vector.broadcast %3 : vector<1x1024xf32> to vector<2x1024xf32>
    %5 = arith.addf %2, %4 : vector<2x1024xf32>
    %c0_5 = arith.constant 0 : index
    %c0_6 = arith.constant 0 : index
    %6 = vector.load %arg5[%c0_5, %c0_6] : memref<2x1024xf32, #tpu.memory_space<vmem>>, vector<2x1024xf32>
    tpu.vector_store %arg5[%c0_5, %c0_6], %5 {strides = array<i32>} : memref<2x1024xf32, #tpu.memory_space<vmem>>, vector<2x1024xf32>,
    return
  }
  func.func @transform_0(%arg0: i32, %arg1: i32) -> (i32, i32) {
    %c0_i32 = arith.constant 0 : i32
    %c0_i32_0 = arith.constant 0 : i32
    return %arg0, %c0_i32 : i32, i32
  }
  func.func @transform_1(%arg0: i32, %arg1: i32) -> (i32, i32) {
    %c0_i32 = arith.constant 0 : i32
    %c0_i32_0 = arith.constant 0 : i32
    return %c0_i32, %arg1 : i32, i32
  }
  func.func @transform_2(%arg0: i32, %arg1: i32) -> (i32, i32) {
    %c0_i32 = arith.constant 0 : i32
    %c0_i32_0 = arith.constant 0 : i32
    return %c0_i32, %arg1 : i32, i32
  }
  func.func @transform_3(%arg0: i32, %arg1: i32) -> (i32, i32) {
    %c0_i32 = arith.constant 0 : i32
    return %arg0, %arg1 : i32, i32
  }
}

</mosaic_0001>

<llo_original>
// kernel: tpu_custom_call.1
$region0: #{tpu_custom_call.1}
  #allocation0 [shape = 'u32[]', space=smem, size = 0x4, offset = 0x4, fixed_abs, tag = 'smem constant byte address 0x4 - core index']
  #allocation1 [shape = 'u32[144,128]{1,0:T(1,128)}', space=vmem, size = 0x12000, scoped, tag = 'internal scratch']
  %s0 = inlined_call_operand.hbm [shape: f32[2,1024], index: 0, kind: input, shape index: {}]
  %s1 = inlined_call_operand.hbm [shape: f32[1024,1024], index: 1, kind: input, shape index: {}]
  %s2 = inlined_call_operand.hbm [shape: f32[1,1024], index: 2, kind: input, shape index: {}]
  %s3 = inlined_call_operand.hbm [shape: f32[2,1024], index: 3, kind: output, shape index: {}]
  %s4 = sld [smem:[#allocation0]]
  $region34: #{tpu_custom_call.1} parent=0
    _
  %s6 = ssub.s32 1, %s4
  %s7 = scalar_select 0, %s6, %s4
  $region1: #{tpu_custom_call.1} parent=0
    #allocation2 [shape = 'u8[8192]{0}', space=vmem, size = 0x2000, scoped, tag = 'input window, operand 0, single buffered']
    #allocation3 [shape = 's32[1]{0}', space=sflag, size = 0x4, scoped, tag = 'scoped memory for tpu_custom_call.1']
    #allocation4 [shape = 's32[1]{0}', space=sflag, size = 0x4, scoped, tag = 'scoped memory for tpu_custom_call.1']
    #allocation5 [shape = 'u8[4194304]{0}', space=vmem, size = 0x400000, scoped, tag = 'input window, operand 1, single buffered']
    #allocation6 [shape = 's32[1]{0}', space=sflag, size = 0x4, scoped, tag = 'scoped memory for tpu_custom_call.1']
    #allocation7 [shape = 'u8[4096]{0}', space=vmem, size = 0x1000, scoped, tag = 'input window, operand 2, single buffered']
    #allocation8 [shape = 'u8[8192]{0}', space=vmem, size = 0x2000, scoped, tag = 'output window, operand 0, single buffered']
    %8 = vsyncpa [#allocation3], 0
    %9 = vsyncpa [#allocation6], 0
    %10 = vsyncpa [#allocation4], 0
    // Predicated region
    $region2: #{tpu_custom_call.1} parent=1 // pred_check
      _
    $region3: #{tpu_custom_call.1} parent=1 // pred_check_branch
      %12 = sbr.rel (0) target = $region5
    $region4: #{tpu_custom_call.1} parent=1 // pred_region
      %s14 = ssub.s32 256, 256
      %15 = vsyncadd [#allocation3], %s14
      %s17 = sshll.u32 [#allocation2], 4
      %s18 = int_to_ptr.vmem [resolvable:$true] %s17
      %20 = dma.hbm_to_vmem [thread:$0]  %s0, 256, %s18, [#allocation3]
    $region5: #{tpu_custom_call.1} parent=1 // pred_fallthru
      _
    // Predicated region
    $region6: #{tpu_custom_call.1} parent=1 // pred_check
      _
    $region7: #{tpu_custom_call.1} parent=1 // pred_check_branch
      %22 = sbr.rel (0) target = $region9
    $region8: #{tpu_custom_call.1} parent=1 // pred_region
      %s24 = ssub.s32 131072, 131072
      %25 = vsyncadd [#allocation6], %s24
      %s26 = sshll.u32 [#allocation5], 4
      %s27 = int_to_ptr.vmem [resolvable:$true] %s26
      %32 = dma.hbm_to_vmem [thread:$0]  %s1, 131072, %s27, [#allocation6], 1024, 1024, 64
    $region9: #{tpu_custom_call.1} parent=1 // pred_fallthru
      _
    // Predicated region
    $region10: #{tpu_custom_call.1} parent=1 // pred_check
      _
    $region11: #{tpu_custom_call.1} parent=1 // pred_check_branch
      %34 = sbr.rel (0) target = $region13
    $region12: #{tpu_custom_call.1} parent=1 // pred_region
      %s36 = ssub.s32 128, 128
      %37 = vsyncadd [#allocation6], %s36
      %s39 = sshll.u32 [#allocation7], 4
      %s40 = int_to_ptr.vmem [resolvable:$true] %s39
      %42 = dma.hbm_to_vmem [thread:$0]  %s2, 128, %s40, [#allocation6]
    $region13: #{tpu_custom_call.1} parent=1 // pred_fallthru
      _
    // Predicated region
    $region14: #{tpu_custom_call.1} parent=1 // pred_check
      _
    $region15: #{tpu_custom_call.1} parent=1 // pred_check_branch
      %44 = sbr.rel (0) target = $region17
    $region16: #{tpu_custom_call.1} parent=1 // pred_region
      %45 = dma.done [#allocation3], 256
    $region17: #{tpu_custom_call.1} parent=1 // pred_fallthru
      _
    // Predicated region
    $region18: #{tpu_custom_call.1} parent=1 // pred_check
      _
    $region19: #{tpu_custom_call.1} parent=1 // pred_check_branch
      %47 = sbr.rel (0) target = $region21
    $region20: #{tpu_custom_call.1} parent=1 // pred_region
      %48 = dma.done [#allocation6], 131072
    $region21: #{tpu_custom_call.1} parent=1 // pred_fallthru
      _
    // Predicated region
    $region22: #{tpu_custom_call.1} parent=1 // pred_check
      _
    $region23: #{tpu_custom_call.1} parent=1 // pred_check_branch
      %50 = sbr.rel (0) target = $region25
    $region24: #{tpu_custom_call.1} parent=1 // pred_region
      %51 = dma.done [#allocation6], 128
    $region25: #{tpu_custom_call.1} parent=1 // pred_fallthru
      _
    %v52 = vld [vmem:[#allocation2] sm:$0xff]
    %v53 = vld [vmem:[#allocation2 + $0x8] sm:$0xff]
    %v54 = vld [vmem:[#allocation5] sm:$0xff]
    %v55 = vld [vmem:[#allocation5 + $0x8] sm:$0xff]
    %v56 = vld [vmem:[#allocation5 + $0x10] sm:$0xff]
    %v57 = vld [vmem:[#allocation5 + $0x18] sm:$0xff]
    %v58 = vld [vmem:[#allocation5 + $0x20] sm:$0xff]
    %v59 = vld [vmem:[#allocation5 + $0x28] sm:$0xff]
    %v60 = vld [vmem:[#allocation5 + $0x30] sm:$0xff]
    %v61 = vld [vmem:[#allocation5 + $0x38] sm:$0xff]
    %v62 = vld [vmem:[#allocation5 + $0x40] sm:$0xff]
    %v63 = vld [vmem:[#allocation5 + $0x48] sm:$0xff]
    %v64 = vld [vmem:[#allocation5 + $0x50] sm:$0xff]
    %v65 = vld [vmem:[#allocation5 + $0x58] sm:$0xff]
    %v66 = vld [vmem:[#allocation5 + $0x60] sm:$0xff]
    %v67 = vld [vmem:[#allocation5 + $0x68] sm:$0xff]
    %v68 = vld [vmem:[#allocation5 + $0x70] sm:$0xff]
    %v69 = vld [vmem:[#allocation5 + $0x78] sm:$0xff]
    %v70 = vld [vmem:[#allocation5 + $0x80] sm:$0xff]
    %v71 = vld [vmem:[#allocation5 + $0x88] sm:$0xff]
    %v72 = vld [vmem:[#allocation5 + $0x90] sm:$0xff]
    %v73 = vld [vmem:[#allocation5 + $0x98] sm:$0xff]
    %v74 = vld [vmem:[#allocation5 + $0xa0] sm:$0xff]
    %v75 = vld [vmem:[#allocation5 + $0xa8] sm:$0xff]
    %v76 = vld [vmem:[#allocation5 + $0xb0] sm:$0xff]
    %v77 = vld [vmem:[#allocation5 + $0xb8] sm:$0xff]
    %v78 = vld [vmem:[#allocation5 + $0xc0] sm:$0xff]
    %v79 = vld [vmem:[#allocation5 + $0xc8] sm:$0xff]
    %v80 = vld [vmem:[#allocation5 + $0xd0] sm:$0xff]
    %v81 = vld [vmem:[#allocation5 + $0xd8] sm:$0xff]
    %v82 = vld [vmem:[#allocation5 + $0xe0] sm:$0xff]
    %v83 = vld [vmem:[#allocation5 + $0xe8] sm:$0xff]
    %v84 = vld [vmem:[#allocation5 + $0xf0] sm:$0xff]
    %v85 = vld [vmem:[#allocation5 + $0xf8] sm:$0xff]
    %v86 = vld [vmem:[#allocation5 + $0x100] sm:$0xff]
    %v87 = vld [vmem:[#allocation5 + $0x108] sm:$0xff]
    %v88 = vld [vmem:[#allocation5 + $0x110] sm:$0xff]
    %v89 = vld [vmem:[#allocation5 + $0x118] sm:$0xff]
    %v90 = vld [vmem:[#allocation5 + $0x120] sm:$0xff]
    %v91 = vld [vmem:[#allocation5 + $0x128] sm:$0xff]
    %v92 = vld [vmem:[#allocation5 + $0x130] sm:$0xff]
    %v93 = vld [vmem:[#allocation5 + $0x138] sm:$0xff]
    %v94 = vld [vmem:[#allocation5 + $0x140] sm:$0xff]
    %v95 = vld [vmem:[#allocation5 + $0x148] sm:$0xff]
    %v96 = vld [vmem:[#allocation5 + $0x150] sm:$0xff]
    %v97 = vld [vmem:[#allocation5 + $0x158] sm:$0xff]
    %v98 = vld [vmem:[#allocation5 + $0x160] sm:$0xff]
    %v99 = vld [vmem:[#allocation5 + $0x168] sm:$0xff]
    %v100 = vld [vmem:[#allocation5 + $0x170] sm:$0xff]
    %v101 = vld [vmem:[#allocation5 + $0x178] sm:$0xff]
    %v102 = vld [vmem:[#allocation5 + $0x180] sm:$0xff]
    %v103 = vld [vmem:[#allocation5 + $0x188] sm:$0xff]
    %v104 = vld [vmem:[#allocation5 + $0x190] sm:$0xff]
    %v105 = vld [vmem:[#allocation5 + $0x198] sm:$0xff]
    %v106 = vld [vmem:[#allocation5 + $0x1a0] sm:$0xff]
    %v107 = vld [vmem:[#allocation5 + $0x1a8] sm:$0xff]
    %v108 = vld [vmem:[#allocation5 + $0x1b0] sm:$0xff]
    %v109 = vld [vmem:[#allocation5 + $0x1b8] sm:$0xff]
    %v110 = vld [vmem:[#allocation5 + $0x1c0] sm:$0xff]
    %v111 = vld [vmem:[#allocation5 + $0x1c8] sm:$0xff]
    %v112 = vld [vmem:[#allocation5 + $0x1d0] sm:$0xff]
    %v113 = vld [vmem:[#allocation5 + $0x1d8] sm:$0xff]
    %v114 = vld [vmem:[#allocation5 + $0x1e0] sm:$0xff]
    %v115 = vld [vmem:[#allocation5 + $0x1e8] sm:$0xff]
    %v116 = vld [vmem:[#allocation5 + $0x1f0] sm:$0xff]
    %v117 = vld [vmem:[#allocation5 + $0x1f8] sm:$0xff]
    %v118 = vld [vmem:[#allocation5 + $0x200] sm:$0xff]
    %v119 = vld [vmem:[#allocation5 + $0x208] sm:$0xff]
    %v120 = vld [vmem:[#allocation5 + $0x210] sm:$0xff]
    %v121 = vld [vmem:[#allocation5 + $0x218] sm:$0xff]
    %v122 = vld [vmem:[#allocation5 + $0x220] sm:$0xff]
    %v123 = vld [vmem:[#allocation5 + $0x228] sm:$0xff]
    %v124 = vld [vmem:[#allocation5 + $0x230] sm:$0xff]
    %v125 = vld [vmem:[#allocation5 + $0x238] sm:$0xff]
    %v126 = vld [vmem:[#allocation5 + $0x240] sm:$0xff]
    %v127 = vld [vmem:[#allocation5 + $0x248] sm:$0xff]
    %v128 = vld [vmem:[#allocation5 + $0x250] sm:$0xff]
    %v129 = vld [vmem:[#allocation5 + $0x258] sm:$0xff]
    %v130 = vld [vmem:[#allocation5 + $0x260] sm:$0xff]
    %v131 = vld [vmem:[#allocation5 + $0x268] sm:$0xff]
    %v132 = vld [vmem:[#allocation5 + $0x270] sm:$0xff]
    %v133 = vld [vmem:[#allocation5 + $0x278] sm:$0xff]
    %v134 = vld [vmem:[#allocation5 + $0x280] sm:$0xff]
    %v135 = vld [vmem:[#allocation5 + $0x288] sm:$0xff]
    %v136 = vld [vmem:[#allocation5 + $0x290] sm:$0xff]
    %v137 = vld [vmem:[#allocation5 + $0x298] sm:$0xff]
    %v138 = vld [vmem:[#allocation5 + $0x2a0] sm:$0xff]
    %v139 = vld [vmem:[#allocation5 + $0x2a8] sm:$0xff]
    %v140 = vld [vmem:[#allocation5 + $0x2b0] sm:$0xff]
    %v141 = vld [vmem:[#allocation5 + $0x2b8] sm:$0xff]
    %v142 = vld [vmem:[#allocation5 + $0x2c0] sm:$0xff]
    %v143 = vld [vmem:[#allocation5 + $0x2c8] sm:$0xff]
    %v144 = vld [vmem:[#allocation5 + $0x2d0] sm:$0xff]
    %v145 = vld [vmem:[#allocation5 + $0x2d8] sm:$0xff]
    %v146 = vld [vmem:[#allocation5 + $0x2e0] sm:$0xff]
    %v147 = vld [vmem:[#allocation5 + $0x2e8] sm:$0xff]
    %v148 = vld [vmem:[#allocation5 + $0x2f0] sm:$0xff]
    %v149 = vld [vmem:[#allocation5 + $0x2f8] sm:$0xff]
    %v150 = vld [vmem:[#allocation5 + $0x300] sm:$0xff]
    %v151 = vld [vmem:[#allocation5 + $0x308] sm:$0xff]
    %v152 = vld [vmem:[#allocation5 + $0x310] sm:$0xff]
    %v153 = vld [vmem:[#allocation5 + $0x318] sm:$0xff]
    %v154 = vld [vmem:[#allocation5 + $0x320] sm:$0xff]
    %v155 = vld [vmem:[#allocation5 + $0x328] sm:$0xff]
    %v156 = vld [vmem:[#allocation5 + $0x330] sm:$0xff]
    %v157 = vld [vmem:[#allocation5 + $0x338] sm:$0xff]
    %v158 = vld [vmem:[#allocation5 + $0x340] sm:$0xff]
    %v159 = vld [vmem:[#allocation5 + $0x348] sm:$0xff]
    %v160 = vld [vmem:[#allocation5 + $0x350] sm:$0xff]
    %v161 = vld [vmem:[#allocation5 + $0x358] sm:$0xff]
    %v162 = vld [vmem:[#allocation5 + $0x360] sm:$0xff]
    %v163 = vld [vmem:[#allocation5 + $0x368] sm:$0xff]
    %v164 = vld [vmem:[#allocation5 + $0x370] sm:$0xff]
    %v165 = vld [vmem:[#allocation5 + $0x378] sm:$0xff]
    %v166 = vld [vmem:[#allocation5 + $0x380] sm:$0xff]
    %v167 = vld [vmem:[#allocation5 + $0x388] sm:$0xff]
    %v168 = vld [vmem:[#allocation5 + $0x390] sm:$0xff]
    %v169 = vld [vmem:[#allocation5 + $0x398] sm:$0xff]
    %v170 = vld [vmem:[#allocation5 + $0x3a0] sm:$0xff]
    %v171 = vld [vmem:[#allocation5 + $0x3a8] sm:$0xff]
    %v172 = vld [vmem:[#allocation5 + $0x3b0] sm:$0xff]
    %v173 = vld [vmem:[#allocation5 + $0x3b8] sm:$0xff]
    %v174 = vld [vmem:[#allocation5 + $0x3c0] sm:$0xff]
    %v175 = vld [vmem:[#allocation5 + $0x3c8] sm:$0xff]
    %v176 = vld [vmem:[#allocation5 + $0x3d0] sm:$0xff]
    %v177 = vld [vmem:[#allocation5 + $0x3d8] sm:$0xff]
    %v178 = vld [vmem:[#allocation5 + $0x3e0] sm:$0xff]
    %v179 = vld [vmem:[#allocation5 + $0x3e8] sm:$0xff]
    %v180 = vld [vmem:[#allocation5 + $0x3f0] sm:$0xff]
    %v181 = vld [vmem:[#allocation5 + $0x3f8] sm:$0xff]
    %v182 = vld [vmem:[#allocation5 + $0x400] sm:$0xff]
    %v183 = vld [vmem:[#allocation5 + $0x408] sm:$0xff]
    %v184 = vld [vmem:[#allocation5 + $0x410] sm:$0xff]
    %v185 = vld [vmem:[#allocation5 + $0x418] sm:$0xff]
    %v186 = vld [vmem:[#allocation5 + $0x420] sm:$0xff]
    %v187 = vld [vmem:[#allocation5 + $0x428] sm:$0xff]
    %v188 = vld [vmem:[#allocation5 + $0x430] sm:$0xff]
    %v189 = vld [vmem:[#allocation5 + $0x438] sm:$0xff]
    %v190 = vld [vmem:[#allocation5 + $0x440] sm:$0xff]
    %v191 = vld [vmem:[#allocation5 + $0x448] sm:$0xff]
    %v192 = vld [vmem:[#allocation5 + $0x450] sm:$0xff]
    %v193 = vld [vmem:[#allocation5 + $0x458] sm:$0xff]
    %v194 = vld [vmem:[#allocation5 + $0x460] sm:$0xff]
    %v195 = vld [vmem:[#allocation5 + $0x468] sm:$0xff]
    %v196 = vld [vmem:[#allocation5 + $0x470] sm:$0xff]
    %v197 = vld [vmem:[#allocation5 + $0x478] sm:$0xff]
    %v198 = vld [vmem:[#allocation5 + $0x480] sm:$0xff]
    %v199 = vld [vmem:[#allocation5 + $0x488] sm:$0xff]
    %v200 = vld [vmem:[#allocation5 + $0x490] sm:$0xff]
    %v201 = vld [vmem:[#allocation5 + $0x498] sm:$0xff]
    %v202 = vld [vmem:[#allocation5 + $0x4a0] sm:$0xff]
    %v203 = vld [vmem:[#allocation5 + $0x4a8] sm:$0xff]
    %v204 = vld [vmem:[#allocation5 + $0x4b0] sm:$0xff]
    %v205 = vld [vmem:[#allocation5 + $0x4b8] sm:$0xff]
    %v206 = vld [vmem:[#allocation5 + $0x4c0] sm:$0xff]
    %v207 = vld [vmem:[#allocation5 + $0x4c8] sm:$0xff]
    %v208 = vld [vmem:[#allocation5 + $0x4d0] sm:$0xff]
    %v209 = vld [vmem:[#allocation5 + $0x4d8] sm:$0xff]
    %v210 = vld [vmem:[#allocation5 + $0x4e0] sm:$0xff]
    %v211 = vld [vmem:[#allocation5 + $0x4e8] sm:$0xff]
    %v212 = vld [vmem:[#allocation5 + $0x4f0] sm:$0xff]
    %v213 = vld [vmem:[#allocation5 + $0x4f8] sm:$0xff]
    %v214 = vld [vmem:[#allocation5 + $0x500] sm:$0xff]
    %v215 = vld [vmem:[#allocation5 + $0x508] sm:$0xff]
    %v216 = vld [vmem:[#allocation5 + $0x510] sm:$0xff]
    %v217 = vld [vmem:[#allocation5 + $0x518] sm:$0xff]
    %v218 = vld [vmem:[#allocation5 + $0x520] sm:$0xff]
    %v219 = vld [vmem:[#allocation5 + $0x528] sm:$0xff]
    %v220 = vld [vmem:[#allocation5 + $0x530] sm:$0xff]
    %v221 = vld [vmem:[#allocation5 + $0x538] sm:$0xff]
    %v222 = vld [vmem:[#allocation5 + $0x540] sm:$0xff]
    %v223 = vld [vmem:[#allocation5 + $0x548] sm:$0xff]
    %v224 = vld [vmem:[#allocation5 + $0x550] sm:$0xff]
    %v225 = vld [vmem:[#allocation5 + $0x558] sm:$0xff]
    %v226 = vld [vmem:[#allocation5 + $0x560] sm:$0xff]
    %v227 = vld [vmem:[#allocation5 + $0x568] sm:$0xff]
    %v228 = vld [vmem:[#allocation5 + $0x570] sm:$0xff]
    %v229 = vld [vmem:[#allocation5 + $0x578] sm:$0xff]
    %v230 = vld [vmem:[#allocation5 + $0x580] sm:$0xff]
    %v231 = vld [vmem:[#allocation5 + $0x588] sm:$0xff]
    %v232 = vld [vmem:[#allocation5 + $0x590] sm:$0xff]
    %v233 = vld [vmem:[#allocation5 + $0x598] sm:$0xff]
    %v234 = vld [vmem:[#allocation5 + $0x5a0] sm:$0xff]
    %v235 = vld [vmem:[#allocation5 + $0x5a8] sm:$0xff]
    %v236 = vld [vmem:[#allocation5 + $0x5b0] sm:$0xff]
    %v237 = vld [vmem:[#allocation5 + $0x5b8] sm:$0xff]
    %v238 = vld [vmem:[#allocation5 + $0x5c0] sm:$0xff]
    %v239 = vld [vmem:[#allocation5 + $0x5c8] sm:$0xff]
    %v240 = vld [vmem:[#allocation5 + $0x5d0] sm:$0xff]
    %v241 = vld [vmem:[#allocation5 + $0x5d8] sm:$0xff]
    %v242 = vld [vmem:[#allocation5 + $0x5e0] sm:$0xff]
    %v243 = vld [vmem:[#allocation5 + $0x5e8] sm:$0xff]
    %v244 = vld [vmem:[#allocation5 + $0x5f0] sm:$0xff]
    %v245 = vld [vmem:[#allocation5 + $0x5f8] sm:$0xff]
    %v246 = vld [vmem:[#allocation5 + $0x600] sm:$0xff]
    %v247 = vld [vmem:[#allocation5 + $0x608] sm:$0xff]
    %v248 = vld [vmem:[#allocation5 + $0x610] sm:$0xff]
    %v249 = vld [vmem:[#allocation5 + $0x618] sm:$0xff]
    %v250 = vld [vmem:[#allocation5 + $0x620] sm:$0xff]
    %v251 = vld [vmem:[#allocation5 + $0x628] sm:$0xff]
    %v252 = vld [vmem:[#allocation5 + $0x630] sm:$0xff]
    %v253 = vld [vmem:[#allocation5 + $0x638] sm:$0xff]
    %v254 = vld [vmem:[#allocation5 + $0x640] sm:$0xff]
    %v255 = vld [vmem:[#allocation5 + $0x648] sm:$0xff]
    %v256 = vld [vmem:[#allocation5 + $0x650] sm:$0xff]
    %v257 = vld [vmem:[#allocation5 + $0x658] sm:$0xff]
    %v258 = vld [vmem:[#allocation5 + $0x660] sm:$0xff]
    %v259 = vld [vmem:[#allocation5 + $0x668] sm:$0xff]
    %v260 = vld [vmem:[#allocation5 + $0x670] sm:$0xff]
    %v261 = vld [vmem:[#allocation5 + $0x678] sm:$0xff]
    %v262 = vld [vmem:[#allocation5 + $0x680] sm:$0xff]
    %v263 = vld [vmem:[#allocation5 + $0x688] sm:$0xff]
    %v264 = vld [vmem:[#allocation5 + $0x690] sm:$0xff]
    %v265 = vld [vmem:[#allocation5 + $0x698] sm:$0xff]
    %v266 = vld [vmem:[#allocation5 + $0x6a0] sm:$0xff]
    %v267 = vld [vmem:[#allocation5 + $0x6a8] sm:$0xff]
    %v268 = vld [vmem:[#allocation5 + $0x6b0] sm:$0xff]
    %v269 = vld [vmem:[#allocation5 + $0x6b8] sm:$0xff]
    %v270 = vld [vmem:[#allocation5 + $0x6c0] sm:$0xff]
    %v271 = vld [vmem:[#allocation5 + $0x6c8] sm:$0xff]
    %v272 = vld [vmem:[#allocation5 + $0x6d0] sm:$0xff]
    %v273 = vld [vmem:[#allocation5 + $0x6d8] sm:$0xff]
    %v274 = vld [vmem:[#allocation5 + $0x6e0] sm:$0xff]
    %v275 = vld [vmem:[#allocation5 + $0x6e8] sm:$0xff]
    %v276 = vld [vmem:[#allocation5 + $0x6f0] sm:$0xff]
    %v277 = vld [vmem:[#allocation5 + $0x6f8] sm:$0xff]
    %v278 = vld [vmem:[#allocation5 + $0x700] sm:$0xff]
    %v279 = vld [vmem:[#allocation5 + $0x708] sm:$0xff]
    %v280 = vld [vmem:[#allocation5 + $0x710] sm:$0xff]
    %v281 = vld [vmem:[#allocation5 + $0x718] sm:$0xff]
    %v282 = vld [vmem:[#allocation5 + $0x720] sm:$0xff]
    %v283 = vld [vmem:[#allocation5 + $0x728] sm:$0xff]
    %v284 = vld [vmem:[#allocation5 + $0x730] sm:$0xff]
    %v285 = vld [vmem:[#allocation5 + $0x738] sm:$0xff]
    %v286 = vld [vmem:[#allocation5 + $0x740] sm:$0xff]
    %v287 = vld [vmem:[#allocation5 + $0x748] sm:$0xff]
    %v288 = vld [vmem:[#allocation5 + $0x750] sm:$0xff]
    %v289 = vld [vmem:[#allocation5 + $0x758] sm:$0xff]
    %v290 = vld [vmem:[#allocation5 + $0x760] sm:$0xff]
    %v291 = vld [vmem:[#allocation5 + $0x768] sm:$0xff]
    %v292 = vld [vmem:[#allocation5 + $0x770] sm:$0xff]
    %v293 = vld [vmem:[#allocation5 + $0x778] sm:$0xff]
    %v294 = vld [vmem:[#allocation5 + $0x780] sm:$0xff]
    %v295 = vld [vmem:[#allocation5 + $0x788] sm:$0xff]
    %v296 = vld [vmem:[#allocation5 + $0x790] sm:$0xff]
    %v297 = vld [vmem:[#allocation5 + $0x798] sm:$0xff]
    %v298 = vld [vmem:[#allocation5 + $0x7a0] sm:$0xff]
    %v299 = vld [vmem:[#allocation5 + $0x7a8] sm:$0xff]
    %v300 = vld [vmem:[#allocation5 + $0x7b0] sm:$0xff]
    %v301 = vld [vmem:[#allocation5 + $0x7b8] sm:$0xff]
    %v302 = vld [vmem:[#allocation5 + $0x7c0] sm:$0xff]
    %v303 = vld [vmem:[#allocation5 + $0x7c8] sm:$0xff]
    %v304 = vld [vmem:[#allocation5 + $0x7d0] sm:$0xff]
    %v305 = vld [vmem:[#allocation5 + $0x7d8] sm:$0xff]
    %v306 = vld [vmem:[#allocation5 + $0x7e0] sm:$0xff]
    %v307 = vld [vmem:[#allocation5 + $0x7e8] sm:$0xff]
    %v308 = vld [vmem:[#allocation5 + $0x7f0] sm:$0xff]
    %v309 = vld [vmem:[#allocation5 + $0x7f8] sm:$0xff]
    %v310 = vld [vmem:[#allocation5 + $0x800] sm:$0xff]
    %v311 = vld [vmem:[#allocation5 + $0x808] sm:$0xff]
    %v312 = vld [vmem:[#allocation5 + $0x810] sm:$0xff]
    %v313 = vld [vmem:[#allocation5 + $0x818] sm:$0xff]
    %v314 = vld [vmem:[#allocation5 + $0x820] sm:$0xff]
    %v315 = vld [vmem:[#allocation5 + $0x828] sm:$0xff]
    %v316 = vld [vmem:[#allocation5 + $0x830] sm:$0xff]
    %v317 = vld [vmem:[#allocation5 + $0x838] sm:$0xff]
    %v318 = vld [vmem:[#allocation5 + $0x840] sm:$0xff]
    %v319 = vld [vmem:[#allocation5 + $0x848] sm:$0xff]
    %v320 = vld [vmem:[#allocation5 + $0x850] sm:$0xff]
    %v321 = vld [vmem:[#allocation5 + $0x858] sm:$0xff]
    %v322 = vld [vmem:[#allocation5 + $0x860] sm:$0xff]
    %v323 = vld [vmem:[#allocation5 + $0x868] sm:$0xff]
    %v324 = vld [vmem:[#allocation5 + $0x870] sm:$0xff]
    %v325 = vld [vmem:[#allocation5 + $0x878] sm:$0xff]
    %v326 = vld [vmem:[#allocation5 + $0x880] sm:$0xff]
    %v327 = vld [vmem:[#allocation5 + $0x888] sm:$0xff]
    %v328 = vld [vmem:[#allocation5 + $0x890] sm:$0xff]
    %v329 = vld [vmem:[#allocation5 + $0x898] sm:$0xff]
    %v330 = vld [vmem:[#allocation5 + $0x8a0] sm:$0xff]
    %v331 = vld [vmem:[#allocation5 + $0x8a8] sm:$0xff]
    %v332 = vld [vmem:[#allocation5 + $0x8b0] sm:$0xff]
    %v333 = vld [vmem:[#allocation5 + $0x8b8] sm:$0xff]
    %v334 = vld [vmem:[#allocation5 + $0x8c0] sm:$0xff]
    %v335 = vld [vmem:[#allocation5 + $0x8c8] sm:$0xff]
    %v336 = vld [vmem:[#allocation5 + $0x8d0] sm:$0xff]
    %v337 = vld [vmem:[#allocation5 + $0x8d8] sm:$0xff]
    %v338 = vld [vmem:[#allocation5 + $0x8e0] sm:$0xff]
    %v339 = vld [vmem:[#allocation5 + $0x8e8] sm:$0xff]
    %v340 = vld [vmem:[#allocation5 + $0x8f0] sm:$0xff]
    %v341 = vld [vmem:[#allocation5 + $0x8f8] sm:$0xff]
    %v342 = vld [vmem:[#allocation5 + $0x900] sm:$0xff]
    %v343 = vld [vmem:[#allocation5 + $0x908] sm:$0xff]
    %v344 = vld [vmem:[#allocation5 + $0x910] sm:$0xff]
    %v345 = vld [vmem:[#allocation5 + $0x918] sm:$0xff]
    %v346 = vld [vmem:[#allocation5 + $0x920] sm:$0xff]
    %v347 = vld [vmem:[#allocation5 + $0x928] sm:$0xff]
    %v348 = vld [vmem:[#allocation5 + $0x930] sm:$0xff]
    %v349 = vld [vmem:[#allocation5 + $0x938] sm:$0xff]
    %v350 = vld [vmem:[#allocation5 + $0x940] sm:$0xff]
    %v351 = vld [vmem:[#allocation5 + $0x948] sm:$0xff]
    %v352 = vld [vmem:[#allocation5 + $0x950] sm:$0xff]
    %v353 = vld [vmem:[#allocation5 + $0x958] sm:$0xff]
    %v354 = vld [vmem:[#allocation5 + $0x960] sm:$0xff]
    %v355 = vld [vmem:[#allocation5 + $0x968] sm:$0xff]
    %v356 = vld [vmem:[#allocation5 + $0x970] sm:$0xff]
    %v357 = vld [vmem:[#allocation5 + $0x978] sm:$0xff]
    %v358 = vld [vmem:[#allocation5 + $0x980] sm:$0xff]
    %v359 = vld [vmem:[#allocation5 + $0x988] sm:$0xff]
    %v360 = vld [vmem:[#allocation5 + $0x990] sm:$0xff]
    %v361 = vld [vmem:[#allocation5 + $0x998] sm:$0xff]
    %v362 = vld [vmem:[#allocation5 + $0x9a0] sm:$0xff]
    %v363 = vld [vmem:[#allocation5 + $0x9a8] sm:$0xff]
    %v364 = vld [vmem:[#allocation5 + $0x9b0] sm:$0xff]
    %v365 = vld [vmem:[#allocation5 + $0x9b8] sm:$0xff]
    %v366 = vld [vmem:[#allocation5 + $0x9c0] sm:$0xff]
    %v367 = vld [vmem:[#allocation5 + $0x9c8] sm:$0xff]
    %v368 = vld [vmem:[#allocation5 + $0x9d0] sm:$0xff]
    %v369 = vld [vmem:[#allocation5 + $0x9d8] sm:$0xff]
    %v370 = vld [vmem:[#allocation5 + $0x9e0] sm:$0xff]
    %v371 = vld [vmem:[#allocation5 + $0x9e8] sm:$0xff]
    %v372 = vld [vmem:[#allocation5 + $0x9f0] sm:$0xff]
    %v373 = vld [vmem:[#allocation5 + $0x9f8] sm:$0xff]
    %v374 = vld [vmem:[#allocation5 + $0xa00] sm:$0xff]
    %v375 = vld [vmem:[#allocation5 + $0xa08] sm:$0xff]
    %v376 = vld [vmem:[#allocation5 + $0xa10] sm:$0xff]
    %v377 = vld [vmem:[#allocation5 + $0xa18] sm:$0xff]
    %v378 = vld [vmem:[#allocation5 + $0xa20] sm:$0xff]
    %v379 = vld [vmem:[#allocation5 + $0xa28] sm:$0xff]
    %v380 = vld [vmem:[#allocation5 + $0xa30] sm:$0xff]
    %v381 = vld [vmem:[#allocation5 + $0xa38] sm:$0xff]
    %v382 = vld [vmem:[#allocation5 + $0xa40] sm:$0xff]
    %v383 = vld [vmem:[#allocation5 + $0xa48] sm:$0xff]
    %v384 = vld [vmem:[#allocation5 + $0xa50] sm:$0xff]
    %v385 = vld [vmem:[#allocation5 + $0xa58] sm:$0xff]
    %v386 = vld [vmem:[#allocation5 + $0xa60] sm:$0xff]
    %v387 = vld [vmem:[#allocation5 + $0xa68] sm:$0xff]
    %v388 = vld [vmem:[#allocation5 + $0xa70] sm:$0xff]
    %v389 = vld [vmem:[#allocation5 + $0xa78] sm:$0xff]
    %v390 = vld [vmem:[#allocation5 + $0xa80] sm:$0xff]
    %v391 = vld [vmem:[#allocation5 + $0xa88] sm:$0xff]
    %v392 = vld [vmem:[#allocation5 + $0xa90] sm:$0xff]
    %v393 = vld [vmem:[#allocation5 + $0xa98] sm:$0xff]
    %v394 = vld [vmem:[#allocation5 + $0xaa0] sm:$0xff]
    %v395 = vld [vmem:[#allocation5 + $0xaa8] sm:$0xff]
    %v396 = vld [vmem:[#allocation5 + $0xab0] sm:$0xff]
    %v397 = vld [vmem:[#allocation5 + $0xab8] sm:$0xff]
    %v398 = vld [vmem:[#allocation5 + $0xac0] sm:$0xff]
    %v399 = vld [vmem:[#allocation5 + $0xac8] sm:$0xff]
    %v400 = vld [vmem:[#allocation5 + $0xad0] sm:$0xff]
    %v401 = vld [vmem:[#allocation5 + $0xad8] sm:$0xff]
    %v402 = vld [vmem:[#allocation5 + $0xae0] sm:$0xff]
    %v403 = vld [vmem:[#allocation5 + $0xae8] sm:$0xff]
    %v404 = vld [vmem:[#allocation5 + $0xaf0] sm:$0xff]
    %v405 = vld [vmem:[#allocation5 + $0xaf8] sm:$0xff]
    %v406 = vld [vmem:[#allocation5 + $0xb00] sm:$0xff]
    %v407 = vld [vmem:[#allocation5 + $0xb08] sm:$0xff]
    %v408 = vld [vmem:[#allocation5 + $0xb10] sm:$0xff]
    %v409 = vld [vmem:[#allocation5 + $0xb18] sm:$0xff]
    %v410 = vld [vmem:[#allocation5 + $0xb20] sm:$0xff]
    %v411 = vld [vmem:[#allocation5 + $0xb28] sm:$0xff]
    %v412 = vld [vmem:[#allocation5 + $0xb30] sm:$0xff]
    %v413 = vld [vmem:[#allocation5 + $0xb38] sm:$0xff]
    %v414 = vld [vmem:[#allocation5 + $0xb40] sm:$0xff]
    %v415 = vld [vmem:[#allocation5 + $0xb48] sm:$0xff]
    %v416 = vld [vmem:[#allocation5 + $0xb50] sm:$0xff]
    %v417 = vld [vmem:[#allocation5 + $0xb58] sm:$0xff]
    %v418 = vld [vmem:[#allocation5 + $0xb60] sm:$0xff]
    %v419 = vld [vmem:[#allocation5 + $0xb68] sm:$0xff]
    %v420 = vld [vmem:[#allocation5 + $0xb70] sm:$0xff]
    %v421 = vld [vmem:[#allocation5 + $0xb78] sm:$0xff]
    %v422 = vld [vmem:[#allocation5 + $0xb80] sm:$0xff]
    %v423 = vld [vmem:[#allocation5 + $0xb88] sm:$0xff]
    %v424 = vld [vmem:[#allocation5 + $0xb90] sm:$0xff]
    %v425 = vld [vmem:[#allocation5 + $0xb98] sm:$0xff]
    %v426 = vld [vmem:[#allocation5 + $0xba0] sm:$0xff]
    %v427 = vld [vmem:[#allocation5 + $0xba8] sm:$0xff]
    %v428 = vld [vmem:[#allocation5 + $0xbb0] sm:$0xff]
    %v429 = vld [vmem:[#allocation5 + $0xbb8] sm:$0xff]
    %v430 = vld [vmem:[#allocation5 + $0xbc0] sm:$0xff]
    %v431 = vld [vmem:[#allocation5 + $0xbc8] sm:$0xff]
    %v432 = vld [vmem:[#allocation5 + $0xbd0] sm:$0xff]
    %v433 = vld [vmem:[#allocation5 + $0xbd8] sm:$0xff]
    %v434 = vld [vmem:[#allocation5 + $0xbe0] sm:$0xff]
    %v435 = vld [vmem:[#allocation5 + $0xbe8] sm:$0xff]
    %v436 = vld [vmem:[#allocation5 + $0xbf0] sm:$0xff]
    %v437 = vld [vmem:[#allocation5 + $0xbf8] sm:$0xff]
    %v438 = vld [vmem:[#allocation5 + $0xc00] sm:$0xff]
    %v439 = vld [vmem:[#allocation5 + $0xc08] sm:$0xff]
    %v440 = vld [vmem:[#allocation5 + $0xc10] sm:$0xff]
    %v441 = vld [vmem:[#allocation5 + $0xc18] sm:$0xff]
    %v442 = vld [vmem:[#allocation5 + $0xc20] sm:$0xff]
    %v443 = vld [vmem:[#allocation5 + $0xc28] sm:$0xff]
    %v444 = vld [vmem:[#allocation5 + $0xc30] sm:$0xff]
    %v445 = vld [vmem:[#allocation5 + $0xc38] sm:$0xff]
    %v446 = vld [vmem:[#allocation5 + $0xc40] sm:$0xff]
    %v447 = vld [vmem:[#allocation5 + $0xc48] sm:$0xff]
    %v448 = vld [vmem:[#allocation5 + $0xc50] sm:$0xff]
    %v449 = vld [vmem:[#allocation5 + $0xc58] sm:$0xff]
    %v450 = vld [vmem:[#allocation5 + $0xc60] sm:$0xff]
    %v451 = vld [vmem:[#allocation5 + $0xc68] sm:$0xff]
    %v452 = vld [vmem:[#allocation5 + $0xc70] sm:$0xff]
    %v453 = vld [vmem:[#allocation5 + $0xc78] sm:$0xff]
    %v454 = vld [vmem:[#allocation5 + $0xc80] sm:$0xff]
    %v455 = vld [vmem:[#allocation5 + $0xc88] sm:$0xff]
    %v456 = vld [vmem:[#allocation5 + $0xc90] sm:$0xff]
    %v457 = vld [vmem:[#allocation5 + $0xc98] sm:$0xff]
    %v458 = vld [vmem:[#allocation5 + $0xca0] sm:$0xff]
    %v459 = vld [vmem:[#allocation5 + $0xca8] sm:$0xff]
    %v460 = vld [vmem:[#allocation5 + $0xcb0] sm:$0xff]
    %v461 = vld [vmem:[#allocation5 + $0xcb8] sm:$0xff]
    %v462 = vld [vmem:[#allocation5 + $0xcc0] sm:$0xff]
    %v463 = vld [vmem:[#allocation5 + $0xcc8] sm:$0xff]
    %v464 = vld [vmem:[#allocation5 + $0xcd0] sm:$0xff]
    %v465 = vld [vmem:[#allocation5 + $0xcd8] sm:$0xff]
    %v466 = vld [vmem:[#allocation5 + $0xce0] sm:$0xff]
    %v467 = vld [vmem:[#allocation5 + $0xce8] sm:$0xff]
    %v468 = vld [vmem:[#allocation5 + $0xcf0] sm:$0xff]
    %v469 = vld [vmem:[#allocation5 + $0xcf8] sm:$0xff]
    %v470 = vld [vmem:[#allocation5 + $0xd00] sm:$0xff]
    %v471 = vld [vmem:[#allocation5 + $0xd08] sm:$0xff]
    %v472 = vld [vmem:[#allocation5 + $0xd10] sm:$0xff]
    %v473 = vld [vmem:[#allocation5 + $0xd18] sm:$0xff]
    %v474 = vld [vmem:[#allocation5 + $0xd20] sm:$0xff]
    %v475 = vld [vmem:[#allocation5 + $0xd28] sm:$0xff]
    %v476 = vld [vmem:[#allocation5 + $0xd30] sm:$0xff]
    %v477 = vld [vmem:[#allocation5 + $0xd38] sm:$0xff]
    %v478 = vld [vmem:[#allocation5 + $0xd40] sm:$0xff]
    %v479 = vld [vmem:[#allocation5 + $0xd48] sm:$0xff]
    %v480 = vld [vmem:[#allocation5 + $0xd50] sm:$0xff]
    %v481 = vld [vmem:[#allocation5 + $0xd58] sm:$0xff]
    %v482 = vld [vmem:[#allocation5 + $0xd60] sm:$0xff]
    %v483 = vld [vmem:[#allocation5 + $0xd68] sm:$0xff]
    %v484 = vld [vmem:[#allocation5 + $0xd70] sm:$0xff]
    %v485 = vld [vmem:[#allocation5 + $0xd78] sm:$0xff]
    %v486 = vld [vmem:[#allocation5 + $0xd80] sm:$0xff]
    %v487 = vld [vmem:[#allocation5 + $0xd88] sm:$0xff]
    %v488 = vld [vmem:[#allocation5 + $0xd90] sm:$0xff]
    %v489 = vld [vmem:[#allocation5 + $0xd98] sm:$0xff]
    %v490 = vld [vmem:[#allocation5 + $0xda0] sm:$0xff]
    %v491 = vld [vmem:[#allocation5 + $0xda8] sm:$0xff]
    %v492 = vld [vmem:[#allocation5 + $0xdb0] sm:$0xff]
    %v493 = vld [vmem:[#allocation5 + $0xdb8] sm:$0xff]
    %v494 = vld [vmem:[#allocation5 + $0xdc0] sm:$0xff]
    %v495 = vld [vmem:[#allocation5 + $0xdc8] sm:$0xff]
    %v496 = vld [vmem:[#allocation5 + $0xdd0] sm:$0xff]
    %v497 = vld [vmem:[#allocation5 + $0xdd8] sm:$0xff]
    %v498 = vld [vmem:[#allocation5 + $0xde0] sm:$0xff]
    %v499 = vld [vmem:[#allocation5 + $0xde8] sm:$0xff]
    %v500 = vld [vmem:[#allocation5 + $0xdf0] sm:$0xff]
    %v501 = vld [vmem:[#allocation5 + $0xdf8] sm:$0xff]
    %v502 = vld [vmem:[#allocation5 + $0xe00] sm:$0xff]
    %v503 = vld [vmem:[#allocation5 + $0xe08] sm:$0xff]
    %v504 = vld [vmem:[#allocation5 + $0xe10] sm:$0xff]
    %v505 = vld [vmem:[#allocation5 + $0xe18] sm:$0xff]
    %v506 = vld [vmem:[#allocation5 + $0xe20] sm:$0xff]
    %v507 = vld [vmem:[#allocation5 + $0xe28] sm:$0xff]
    %v508 = vld [vmem:[#allocation5 + $0xe30] sm:$0xff]
    %v509 = vld [vmem:[#allocation5 + $0xe38] sm:$0xff]
    %v510 = vld [vmem:[#allocation5 + $0xe40] sm:$0xff]
    %v511 = vld [vmem:[#allocation5 + $0xe48] sm:$0xff]
    %v512 = vld [vmem:[#allocation5 + $0xe50] sm:$0xff]
    %v513 = vld [vmem:[#allocation5 + $0xe58] sm:$0xff]
    %v514 = vld [vmem:[#allocation5 + $0xe60] sm:$0xff]
    %v515 = vld [vmem:[#allocation5 + $0xe68] sm:$0xff]
    %v516 = vld [vmem:[#allocation5 + $0xe70] sm:$0xff]
    %v517 = vld [vmem:[#allocation5 + $0xe78] sm:$0xff]
    %v518 = vld [vmem:[#allocation5 + $0xe80] sm:$0xff]
    %v519 = vld [vmem:[#allocation5 + $0xe88] sm:$0xff]
    %v520 = vld [vmem:[#allocation5 + $0xe90] sm:$0xff]
    %v521 = vld [vmem:[#allocation5 + $0xe98] sm:$0xff]
    %v522 = vld [vmem:[#allocation5 + $0xea0] sm:$0xff]
    %v523 = vld [vmem:[#allocation5 + $0xea8] sm:$0xff]
    %v524 = vld [vmem:[#allocation5 + $0xeb0] sm:$0xff]
    %v525 = vld [vmem:[#allocation5 + $0xeb8] sm:$0xff]
    %v526 = vld [vmem:[#allocation5 + $0xec0] sm:$0xff]
    %v527 = vld [vmem:[#allocation5 + $0xec8] sm:$0xff]
    %v528 = vld [vmem:[#allocation5 + $0xed0] sm:$0xff]
    %v529 = vld [vmem:[#allocation5 + $0xed8] sm:$0xff]
    %v530 = vld [vmem:[#allocation5 + $0xee0] sm:$0xff]
    %v531 = vld [vmem:[#allocation5 + $0xee8] sm:$0xff]
    %v532 = vld [vmem:[#allocation5 + $0xef0] sm:$0xff]
    %v533 = vld [vmem:[#allocation5 + $0xef8] sm:$0xff]
    %v534 = vld [vmem:[#allocation5 + $0xf00] sm:$0xff]
    %v535 = vld [vmem:[#allocation5 + $0xf08] sm:$0xff]
    %v536 = vld [vmem:[#allocation5 + $0xf10] sm:$0xff]
    %v537 = vld [vmem:[#allocation5 + $0xf18] sm:$0xff]
    %v538 = vld [vmem:[#allocation5 + $0xf20] sm:$0xff]
    %v539 = vld [vmem:[#allocation5 + $0xf28] sm:$0xff]
    %v540 = vld [vmem:[#allocation5 + $0xf30] sm:$0xff]
    %v541 = vld [vmem:[#allocation5 + $0xf38] sm:$0xff]
    %v542 = vld [vmem:[#allocation5 + $0xf40] sm:$0xff]
    %v543 = vld [vmem:[#allocation5 + $0xf48] sm:$0xff]
    %v544 = vld [vmem:[#allocation5 + $0xf50] sm:$0xff]
    %v545 = vld [vmem:[#allocation5 + $0xf58] sm:$0xff]
    %v546 = vld [vmem:[#allocation5 + $0xf60] sm:$0xff]
    %v547 = vld [vmem:[#allocation5 + $0xf68] sm:$0xff]
    %v548 = vld [vmem:[#allocation5 + $0xf70] sm:$0xff]
    %v549 = vld [vmem:[#allocation5 + $0xf78] sm:$0xff]
    %v550 = vld [vmem:[#allocation5 + $0xf80] sm:$0xff]
    %v551 = vld [vmem:[#allocation5 + $0xf88] sm:$0xff]
    %v552 = vld [vmem:[#allocation5 + $0xf90] sm:$0xff]
    %v553 = vld [vmem:[#allocation5 + $0xf98] sm:$0xff]
    %v554 = vld [vmem:[#allocation5 + $0xfa0] sm:$0xff]
    %v555 = vld [vmem:[#allocation5 + $0xfa8] sm:$0xff]
    %v556 = vld [vmem:[#allocation5 + $0xfb0] sm:$0xff]
    %v557 = vld [vmem:[#allocation5 + $0xfb8] sm:$0xff]
    %v558 = vld [vmem:[#allocation5 + $0xfc0] sm:$0xff]
    %v559 = vld [vmem:[#allocation5 + $0xfc8] sm:$0xff]
    %v560 = vld [vmem:[#allocation5 + $0xfd0] sm:$0xff]
    %v561 = vld [vmem:[#allocation5 + $0xfd8] sm:$0xff]
    %v562 = vld [vmem:[#allocation5 + $0xfe0] sm:$0xff]
    %v563 = vld [vmem:[#allocation5 + $0xfe8] sm:$0xff]
    %v564 = vld [vmem:[#allocation5 + $0xff0] sm:$0xff]
    %v565 = vld [vmem:[#allocation5 + $0xff8] sm:$0xff]
    %v566 = vld [vmem:[#allocation5 + $0x1000] sm:$0xff]
    %v567 = vld [vmem:[#allocation5 + $0x1008] sm:$0xff]
    %v568 = vld [vmem:[#allocation5 + $0x1010] sm:$0xff]
    %v569 = vld [vmem:[#allocation5 + $0x1018] sm:$0xff]
    %v570 = vld [vmem:[#allocation5 + $0x1020] sm:$0xff]
    %v571 = vld [vmem:[#allocation5 + $0x1028] sm:$0xff]
    %v572 = vld [vmem:[#allocation5 + $0x1030] sm:$0xff]
    %v573 = vld [vmem:[#allocation5 + $0x1038] sm:$0xff]
    %v574 = vld [vmem:[#allocation5 + $0x1040] sm:$0xff]
    %v575 = vld [vmem:[#allocation5 + $0x1048] sm:$0xff]
    %v576 = vld [vmem:[#allocation5 + $0x1050] sm:$0xff]
    %v577 = vld [vmem:[#allocation5 + $0x1058] sm:$0xff]
    %v578 = vld [vmem:[#allocation5 + $0x1060] sm:$0xff]
    %v579 = vld [vmem:[#allocation5 + $0x1068] sm:$0xff]
    %v580 = vld [vmem:[#allocation5 + $0x1070] sm:$0xff]
    %v581 = vld [vmem:[#allocation5 + $0x1078] sm:$0xff]
    %v582 = vld [vmem:[#allocation5 + $0x1080] sm:$0xff]
    %v583 = vld [vmem:[#allocation5 + $0x1088] sm:$0xff]
    %v584 = vld [vmem:[#allocation5 + $0x1090] sm:$0xff]
    %v585 = vld [vmem:[#allocation5 + $0x1098] sm:$0xff]
    %v586 = vld [vmem:[#allocation5 + $0x10a0] sm:$0xff]
    %v587 = vld [vmem:[#allocation5 + $0x10a8] sm:$0xff]
    %v588 = vld [vmem:[#allocation5 + $0x10b0] sm:$0xff]
    %v589 = vld [vmem:[#allocation5 + $0x10b8] sm:$0xff]
    %v590 = vld [vmem:[#allocation5 + $0x10c0] sm:$0xff]
    %v591 = vld [vmem:[#allocation5 + $0x10c8] sm:$0xff]
    %v592 = vld [vmem:[#allocation5 + $0x10d0] sm:$0xff]
    %v593 = vld [vmem:[#allocation5 + $0x10d8] sm:$0xff]
    %v594 = vld [vmem:[#allocation5 + $0x10e0] sm:$0xff]
    %v595 = vld [vmem:[#allocation5 + $0x10e8] sm:$0xff]
    %v596 = vld [vmem:[#allocation5 + $0x10f0] sm:$0xff]
    %v597 = vld [vmem:[#allocation5 + $0x10f8] sm:$0xff]
    %v598 = vld [vmem:[#allocation5 + $0x1100] sm:$0xff]
    %v599 = vld [vmem:[#allocation5 + $0x1108] sm:$0xff]
    %v600 = vld [vmem:[#allocation5 + $0x1110] sm:$0xff]
    %v601 = vld [vmem:[#allocation5 + $0x1118] sm:$0xff]
    %v602 = vld [vmem:[#allocation5 + $0x1120] sm:$0xff]
    %v603 = vld [vmem:[#allocation5 + $0x1128] sm:$0xff]
    %v604 = vld [vmem:[#allocation5 + $0x1130] sm:$0xff]
    %v605 = vld [vmem:[#allocation5 + $0x1138] sm:$0xff]
    %v606 = vld [vmem:[#allocation5 + $0x1140] sm:$0xff]
    %v607 = vld [vmem:[#allocation5 + $0x1148] sm:$0xff]
    %v608 = vld [vmem:[#allocation5 + $0x1150] sm:$0xff]
    %v609 = vld [vmem:[#allocation5 + $0x1158] sm:$0xff]
    %v610 = vld [vmem:[#allocation5 + $0x1160] sm:$0xff]
    %v611 = vld [vmem:[#allocation5 + $0x1168] sm:$0xff]
    %v612 = vld [vmem:[#allocation5 + $0x1170] sm:$0xff]
    %v613 = vld [vmem:[#allocation5 + $0x1178] sm:$0xff]
    %v614 = vld [vmem:[#allocation5 + $0x1180] sm:$0xff]
    %v615 = vld [vmem:[#allocation5 + $0x1188] sm:$0xff]
    %v616 = vld [vmem:[#allocation5 + $0x1190] sm:$0xff]
    %v617 = vld [vmem:[#allocation5 + $0x1198] sm:$0xff]
    %v618 = vld [vmem:[#allocation5 + $0x11a0] sm:$0xff]
    %v619 = vld [vmem:[#allocation5 + $0x11a8] sm:$0xff]
    %v620 = vld [vmem:[#allocation5 + $0x11b0] sm:$0xff]
    %v621 = vld [vmem:[#allocation5 + $0x11b8] sm:$0xff]
    %v622 = vld [vmem:[#allocation5 + $0x11c0] sm:$0xff]
    %v623 = vld [vmem:[#allocation5 + $0x11c8] sm:$0xff]
    %v624 = vld [vmem:[#allocation5 + $0x11d0] sm:$0xff]
    %v625 = vld [vmem:[#allocation5 + $0x11d8] sm:$0xff]
    %v626 = vld [vmem:[#allocation5 + $0x11e0] sm:$0xff]
    %v627 = vld [vmem:[#allocation5 + $0x11e8] sm:$0xff]
    %v628 = vld [vmem:[#allocation5 + $0x11f0] sm:$0xff]
    %v629 = vld [vmem:[#allocation5 + $0x11f8] sm:$0xff]
    %v630 = vld [vmem:[#allocation5 + $0x1200] sm:$0xff]
    %v631 = vld [vmem:[#allocation5 + $0x1208] sm:$0xff]
    %v632 = vld [vmem:[#allocation5 + $0x1210] sm:$0xff]
    %v633 = vld [vmem:[#allocation5 + $0x1218] sm:$0xff]
    %v634 = vld [vmem:[#allocation5 + $0x1220] sm:$0xff]
    %v635 = vld [vmem:[#allocation5 + $0x1228] sm:$0xff]
    %v636 = vld [vmem:[#allocation5 + $0x1230] sm:$0xff]
    %v637 = vld [vmem:[#allocation5 + $0x1238] sm:$0xff]
    %v638 = vld [vmem:[#allocation5 + $0x1240] sm:$0xff]
    %v639 = vld [vmem:[#allocation5 + $0x1248] sm:$0xff]
    %v640 = vld [vmem:[#allocation5 + $0x1250] sm:$0xff]
    %v641 = vld [vmem:[#allocation5 + $0x1258] sm:$0xff]
    %v642 = vld [vmem:[#allocation5 + $0x1260] sm:$0xff]
    %v643 = vld [vmem:[#allocation5 + $0x1268] sm:$0xff]
    %v644 = vld [vmem:[#allocation5 + $0x1270] sm:$0xff]
    %v645 = vld [vmem:[#allocation5 + $0x1278] sm:$0xff]
    %v646 = vld [vmem:[#allocation5 + $0x1280] sm:$0xff]
    %v647 = vld [vmem:[#allocation5 + $0x1288] sm:$0xff]
    %v648 = vld [vmem:[#allocation5 + $0x1290] sm:$0xff]
    %v649 = vld [vmem:[#allocation5 + $0x1298] sm:$0xff]
    %v650 = vld [vmem:[#allocation5 + $0x12a0] sm:$0xff]
    %v651 = vld [vmem:[#allocation5 + $0x12a8] sm:$0xff]
    %v652 = vld [vmem:[#allocation5 + $0x12b0] sm:$0xff]
    %v653 = vld [vmem:[#allocation5 + $0x12b8] sm:$0xff]
    %v654 = vld [vmem:[#allocation5 + $0x12c0] sm:$0xff]
    %v655 = vld [vmem:[#allocation5 + $0x12c8] sm:$0xff]
    %v656 = vld [vmem:[#allocation5 + $0x12d0] sm:$0xff]
    %v657 = vld [vmem:[#allocation5 + $0x12d8] sm:$0xff]
    %v658 = vld [vmem:[#allocation5 + $0x12e0] sm:$0xff]
    %v659 = vld [vmem:[#allocation5 + $0x12e8] sm:$0xff]
    %v660 = vld [vmem:[#allocation5 + $0x12f0] sm:$0xff]
    %v661 = vld [vmem:[#allocation5 + $0x12f8] sm:$0xff]
    %v662 = vld [vmem:[#allocation5 + $0x1300] sm:$0xff]
    %v663 = vld [vmem:[#allocation5 + $0x1308] sm:$0xff]
    %v664 = vld [vmem:[#allocation5 + $0x1310] sm:$0xff]
    %v665 = vld [vmem:[#allocation5 + $0x1318] sm:$0xff]
    %v666 = vld [vmem:[#allocation5 + $0x1320] sm:$0xff]
    %v667 = vld [vmem:[#allocation5 + $0x1328] sm:$0xff]
    %v668 = vld [vmem:[#allocation5 + $0x1330] sm:$0xff]
    %v669 = vld [vmem:[#allocation5 + $0x1338] sm:$0xff]
    %v670 = vld [vmem:[#allocation5 + $0x1340] sm:$0xff]
    %v671 = vld [vmem:[#allocation5 + $0x1348] sm:$0xff]
    %v672 = vld [vmem:[#allocation5 + $0x1350] sm:$0xff]
    %v673 = vld [vmem:[#allocation5 + $0x1358] sm:$0xff]
    %v674 = vld [vmem:[#allocation5 + $0x1360] sm:$0xff]
    %v675 = vld [vmem:[#allocation5 + $0x1368] sm:$0xff]
    %v676 = vld [vmem:[#allocation5 + $0x1370] sm:$0xff]
    %v677 = vld [vmem:[#allocation5 + $0x1378] sm:$0xff]
    %v678 = vld [vmem:[#allocation5 + $0x1380] sm:$0xff]
    %v679 = vld [vmem:[#allocation5 + $0x1388] sm:$0xff]
    %v680 = vld [vmem:[#allocation5 + $0x1390] sm:$0xff]
    %v681 = vld [vmem:[#allocation5 + $0x1398] sm:$0xff]
    %v682 = vld [vmem:[#allocation5 + $0x13a0] sm:$0xff]
    %v683 = vld [vmem:[#allocation5 + $0x13a8] sm:$0xff]
    %v684 = vld [vmem:[#allocation5 + $0x13b0] sm:$0xff]
    %v685 = vld [vmem:[#allocation5 + $0x13b8] sm:$0xff]
    %v686 = vld [vmem:[#allocation5 + $0x13c0] sm:$0xff]
    %v687 = vld [vmem:[#allocation5 + $0x13c8] sm:$0xff]
    %v688 = vld [vmem:[#allocation5 + $0x13d0] sm:$0xff]
    %v689 = vld [vmem:[#allocation5 + $0x13d8] sm:$0xff]
    %v690 = vld [vmem:[#allocation5 + $0x13e0] sm:$0xff]
    %v691 = vld [vmem:[#allocation5 + $0x13e8] sm:$0xff]
    %v692 = vld [vmem:[#allocation5 + $0x13f0] sm:$0xff]
    %v693 = vld [vmem:[#allocation5 + $0x13f8] sm:$0xff]
    %v694 = vld [vmem:[#allocation5 + $0x1400] sm:$0xff]
    %v695 = vld [vmem:[#allocation5 + $0x1408] sm:$0xff]
    %v696 = vld [vmem:[#allocation5 + $0x1410] sm:$0xff]
    %v697 = vld [vmem:[#allocation5 + $0x1418] sm:$0xff]
    %v698 = vld [vmem:[#allocation5 + $0x1420] sm:$0xff]
    %v699 = vld [vmem:[#allocation5 + $0x1428] sm:$0xff]
    %v700 = vld [vmem:[#allocation5 + $0x1430] sm:$0xff]
    %v701 = vld [vmem:[#allocation5 + $0x1438] sm:$0xff]
    %v702 = vld [vmem:[#allocation5 + $0x1440] sm:$0xff]
    %v703 = vld [vmem:[#allocation5 + $0x1448] sm:$0xff]
    %v704 = vld [vmem:[#allocation5 + $0x1450] sm:$0xff]
    %v705 = vld [vmem:[#allocation5 + $0x1458] sm:$0xff]
    %v706 = vld [vmem:[#allocation5 + $0x1460] sm:$0xff]
    %v707 = vld [vmem:[#allocation5 + $0x1468] sm:$0xff]
    %v708 = vld [vmem:[#allocation5 + $0x1470] sm:$0xff]
    %v709 = vld [vmem:[#allocation5 + $0x1478] sm:$0xff]
    %v710 = vld [vmem:[#allocation5 + $0x1480] sm:$0xff]
    %v711 = vld [vmem:[#allocation5 + $0x1488] sm:$0xff]
    %v712 = vld [vmem:[#allocation5 + $0x1490] sm:$0xff]
    %v713 = vld [vmem:[#allocation5 + $0x1498] sm:$0xff]
    %v714 = vld [vmem:[#allocation5 + $0x14a0] sm:$0xff]
    %v715 = vld [vmem:[#allocation5 + $0x14a8] sm:$0xff]
    %v716 = vld [vmem:[#allocation5 + $0x14b0] sm:$0xff]
    %v717 = vld [vmem:[#allocation5 + $0x14b8] sm:$0xff]
    %v718 = vld [vmem:[#allocation5 + $0x14c0] sm:$0xff]
    %v719 = vld [vmem:[#allocation5 + $0x14c8] sm:$0xff]
    %v720 = vld [vmem:[#allocation5 + $0x14d0] sm:$0xff]
    %v721 = vld [vmem:[#allocation5 + $0x14d8] sm:$0xff]
    %v722 = vld [vmem:[#allocation5 + $0x14e0] sm:$0xff]
    %v723 = vld [vmem:[#allocation5 + $0x14e8] sm:$0xff]
    %v724 = vld [vmem:[#allocation5 + $0x14f0] sm:$0xff]
    %v725 = vld [vmem:[#allocation5 + $0x14f8] sm:$0xff]
    %v726 = vld [vmem:[#allocation5 + $0x1500] sm:$0xff]
    %v727 = vld [vmem:[#allocation5 + $0x1508] sm:$0xff]
    %v728 = vld [vmem:[#allocation5 + $0x1510] sm:$0xff]
    %v729 = vld [vmem:[#allocation5 + $0x1518] sm:$0xff]
    %v730 = vld [vmem:[#allocation5 + $0x1520] sm:$0xff]
    %v731 = vld [vmem:[#allocation5 + $0x1528] sm:$0xff]
    %v732 = vld [vmem:[#allocation5 + $0x1530] sm:$0xff]
    %v733 = vld [vmem:[#allocation5 + $0x1538] sm:$0xff]
    %v734 = vld [vmem:[#allocation5 + $0x1540] sm:$0xff]
    %v735 = vld [vmem:[#allocation5 + $0x1548] sm:$0xff]
    %v736 = vld [vmem:[#allocation5 + $0x1550] sm:$0xff]
    %v737 = vld [vmem:[#allocation5 + $0x1558] sm:$0xff]
    %v738 = vld [vmem:[#allocation5 + $0x1560] sm:$0xff]
    %v739 = vld [vmem:[#allocation5 + $0x1568] sm:$0xff]
    %v740 = vld [vmem:[#allocation5 + $0x1570] sm:$0xff]
    %v741 = vld [vmem:[#allocation5 + $0x1578] sm:$0xff]
    %v742 = vld [vmem:[#allocation5 + $0x1580] sm:$0xff]
    %v743 = vld [vmem:[#allocation5 + $0x1588] sm:$0xff]
    %v744 = vld [vmem:[#allocation5 + $0x1590] sm:$0xff]
    %v745 = vld [vmem:[#allocation5 + $0x1598] sm:$0xff]
    %v746 = vld [vmem:[#allocation5 + $0x15a0] sm:$0xff]
    %v747 = vld [vmem:[#allocation5 + $0x15a8] sm:$0xff]
    %v748 = vld [vmem:[#allocation5 + $0x15b0] sm:$0xff]
    %v749 = vld [vmem:[#allocation5 + $0x15b8] sm:$0xff]
    %v750 = vld [vmem:[#allocation5 + $0x15c0] sm:$0xff]
    %v751 = vld [vmem:[#allocation5 + $0x15c8] sm:$0xff]
    %v752 = vld [vmem:[#allocation5 + $0x15d0] sm:$0xff]
    %v753 = vld [vmem:[#allocation5 + $0x15d8] sm:$0xff]
    %v754 = vld [vmem:[#allocation5 + $0x15e0] sm:$0xff]
    %v755 = vld [vmem:[#allocation5 + $0x15e8] sm:$0xff]
    %v756 = vld [vmem:[#allocation5 + $0x15f0] sm:$0xff]
    %v757 = vld [vmem:[#allocation5 + $0x15f8] sm:$0xff]
    %v758 = vld [vmem:[#allocation5 + $0x1600] sm:$0xff]
    %v759 = vld [vmem:[#allocation5 + $0x1608] sm:$0xff]
    %v760 = vld [vmem:[#allocation5 + $0x1610] sm:$0xff]
    %v761 = vld [vmem:[#allocation5 + $0x1618] sm:$0xff]
    %v762 = vld [vmem:[#allocation5 + $0x1620] sm:$0xff]
    %v763 = vld [vmem:[#allocation5 + $0x1628] sm:$0xff]
    %v764 = vld [vmem:[#allocation5 + $0x1630] sm:$0xff]
    %v765 = vld [vmem:[#allocation5 + $0x1638] sm:$0xff]
    %v766 = vld [vmem:[#allocation5 + $0x1640] sm:$0xff]
    %v767 = vld [vmem:[#allocation5 + $0x1648] sm:$0xff]
    %v768 = vld [vmem:[#allocation5 + $0x1650] sm:$0xff]
    %v769 = vld [vmem:[#allocation5 + $0x1658] sm:$0xff]
    %v770 = vld [vmem:[#allocation5 + $0x1660] sm:$0xff]
    %v771 = vld [vmem:[#allocation5 + $0x1668] sm:$0xff]
    %v772 = vld [vmem:[#allocation5 + $0x1670] sm:$0xff]
    %v773 = vld [vmem:[#allocation5 + $0x1678] sm:$0xff]
    %v774 = vld [vmem:[#allocation5 + $0x1680] sm:$0xff]
    %v775 = vld [vmem:[#allocation5 + $0x1688] sm:$0xff]
    %v776 = vld [vmem:[#allocation5 + $0x1690] sm:$0xff]
    %v777 = vld [vmem:[#allocation5 + $0x1698] sm:$0xff]
    %v778 = vld [vmem:[#allocation5 + $0x16a0] sm:$0xff]
    %v779 = vld [vmem:[#allocation5 + $0x16a8] sm:$0xff]
    %v780 = vld [vmem:[#allocation5 + $0x16b0] sm:$0xff]
    %v781 = vld [vmem:[#allocation5 + $0x16b8] sm:$0xff]
    %v782 = vld [vmem:[#allocation5 + $0x16c0] sm:$0xff]
    %v783 = vld [vmem:[#allocation5 + $0x16c8] sm:$0xff]
    %v784 = vld [vmem:[#allocation5 + $0x16d0] sm:$0xff]
    %v785 = vld [vmem:[#allocation5 + $0x16d8] sm:$0xff]
    %v786 = vld [vmem:[#allocation5 + $0x16e0] sm:$0xff]
    %v787 = vld [vmem:[#allocation5 + $0x16e8] sm:$0xff]
    %v788 = vld [vmem:[#allocation5 + $0x16f0] sm:$0xff]
    %v789 = vld [vmem:[#allocation5 + $0x16f8] sm:$0xff]
    %v790 = vld [vmem:[#allocation5 + $0x1700] sm:$0xff]
    %v791 = vld [vmem:[#allocation5 + $0x1708] sm:$0xff]
    %v792 = vld [vmem:[#allocation5 + $0x1710] sm:$0xff]
    %v793 = vld [vmem:[#allocation5 + $0x1718] sm:$0xff]
    %v794 = vld [vmem:[#allocation5 + $0x1720] sm:$0xff]
    %v795 = vld [vmem:[#allocation5 + $0x1728] sm:$0xff]
    %v796 = vld [vmem:[#allocation5 + $0x1730] sm:$0xff]
    %v797 = vld [vmem:[#allocation5 + $0x1738] sm:$0xff]
    %v798 = vld [vmem:[#allocation5 + $0x1740] sm:$0xff]
    %v799 = vld [vmem:[#allocation5 + $0x1748] sm:$0xff]
    %v800 = vld [vmem:[#allocation5 + $0x1750] sm:$0xff]
    %v801 = vld [vmem:[#allocation5 + $0x1758] sm:$0xff]
    %v802 = vld [vmem:[#allocation5 + $0x1760] sm:$0xff]
    %v803 = vld [vmem:[#allocation5 + $0x1768] sm:$0xff]
    %v804 = vld [vmem:[#allocation5 + $0x1770] sm:$0xff]
    %v805 = vld [vmem:[#allocation5 + $0x1778] sm:$0xff]
    %v806 = vld [vmem:[#allocation5 + $0x1780] sm:$0xff]
    %v807 = vld [vmem:[#allocation5 + $0x1788] sm:$0xff]
    %v808 = vld [vmem:[#allocation5 + $0x1790] sm:$0xff]
    %v809 = vld [vmem:[#allocation5 + $0x1798] sm:$0xff]
    %v810 = vld [vmem:[#allocation5 + $0x17a0] sm:$0xff]
    %v811 = vld [vmem:[#allocation5 + $0x17a8] sm:$0xff]
    %v812 = vld [vmem:[#allocation5 + $0x17b0] sm:$0xff]
    %v813 = vld [vmem:[#allocation5 + $0x17b8] sm:$0xff]
    %v814 = vld [vmem:[#allocation5 + $0x17c0] sm:$0xff]
    %v815 = vld [vmem:[#allocation5 + $0x17c8] sm:$0xff]
    %v816 = vld [vmem:[#allocation5 + $0x17d0] sm:$0xff]
    %v817 = vld [vmem:[#allocation5 + $0x17d8] sm:$0xff]
    %v818 = vld [vmem:[#allocation5 + $0x17e0] sm:$0xff]
    %v819 = vld [vmem:[#allocation5 + $0x17e8] sm:$0xff]
    %v820 = vld [vmem:[#allocation5 + $0x17f0] sm:$0xff]
    %v821 = vld [vmem:[#allocation5 + $0x17f8] sm:$0xff]
    %v822 = vld [vmem:[#allocation5 + $0x1800] sm:$0xff]
    %v823 = vld [vmem:[#allocation5 + $0x1808] sm:$0xff]
    %v824 = vld [vmem:[#allocation5 + $0x1810] sm:$0xff]
    %v825 = vld [vmem:[#allocation5 + $0x1818] sm:$0xff]
    %v826 = vld [vmem:[#allocation5 + $0x1820] sm:$0xff]
    %v827 = vld [vmem:[#allocation5 + $0x1828] sm:$0xff]
    %v828 = vld [vmem:[#allocation5 + $0x1830] sm:$0xff]
    %v829 = vld [vmem:[#allocation5 + $0x1838] sm:$0xff]
    %v830 = vld [vmem:[#allocation5 + $0x1840] sm:$0xff]
    %v831 = vld [vmem:[#allocation5 + $0x1848] sm:$0xff]
    %v832 = vld [vmem:[#allocation5 + $0x1850] sm:$0xff]
    %v833 = vld [vmem:[#allocation5 + $0x1858] sm:$0xff]
    %v834 = vld [vmem:[#allocation5 + $0x1860] sm:$0xff]
    %v835 = vld [vmem:[#allocation5 + $0x1868] sm:$0xff]
    %v836 = vld [vmem:[#allocation5 + $0x1870] sm:$0xff]
    %v837 = vld [vmem:[#allocation5 + $0x1878] sm:$0xff]
    %v838 = vld [vmem:[#allocation5 + $0x1880] sm:$0xff]
    %v839 = vld [vmem:[#allocation5 + $0x1888] sm:$0xff]
    %v840 = vld [vmem:[#allocation5 + $0x1890] sm:$0xff]
    %v841 = vld [vmem:[#allocation5 + $0x1898] sm:$0xff]
    %v842 = vld [vmem:[#allocation5 + $0x18a0] sm:$0xff]
    %v843 = vld [vmem:[#allocation5 + $0x18a8] sm:$0xff]
    %v844 = vld [vmem:[#allocation5 + $0x18b0] sm:$0xff]
    %v845 = vld [vmem:[#allocation5 + $0x18b8] sm:$0xff]
    %v846 = vld [vmem:[#allocation5 + $0x18c0] sm:$0xff]
    %v847 = vld [vmem:[#allocation5 + $0x18c8] sm:$0xff]
    %v848 = vld [vmem:[#allocation5 + $0x18d0] sm:$0xff]
    %v849 = vld [vmem:[#allocation5 + $0x18d8] sm:$0xff]
    %v850 = vld [vmem:[#allocation5 + $0x18e0] sm:$0xff]
    %v851 = vld [vmem:[#allocation5 + $0x18e8] sm:$0xff]
    %v852 = vld [vmem:[#allocation5 + $0x18f0] sm:$0xff]
    %v853 = vld [vmem:[#allocation5 + $0x18f8] sm:$0xff]
    %v854 = vld [vmem:[#allocation5 + $0x1900] sm:$0xff]
    %v855 = vld [vmem:[#allocation5 + $0x1908] sm:$0xff]
    %v856 = vld [vmem:[#allocation5 + $0x1910] sm:$0xff]
    %v857 = vld [vmem:[#allocation5 + $0x1918] sm:$0xff]
    %v858 = vld [vmem:[#allocation5 + $0x1920] sm:$0xff]
    %v859 = vld [vmem:[#allocation5 + $0x1928] sm:$0xff]
    %v860 = vld [vmem:[#allocation5 + $0x1930] sm:$0xff]
    %v861 = vld [vmem:[#allocation5 + $0x1938] sm:$0xff]
    %v862 = vld [vmem:[#allocation5 + $0x1940] sm:$0xff]
    %v863 = vld [vmem:[#allocation5 + $0x1948] sm:$0xff]
    %v864 = vld [vmem:[#allocation5 + $0x1950] sm:$0xff]
    %v865 = vld [vmem:[#allocation5 + $0x1958] sm:$0xff]
    %v866 = vld [vmem:[#allocation5 + $0x1960] sm:$0xff]
    %v867 = vld [vmem:[#allocation5 + $0x1968] sm:$0xff]
    %v868 = vld [vmem:[#allocation5 + $0x1970] sm:$0xff]
    %v869 = vld [vmem:[#allocation5 + $0x1978] sm:$0xff]
    %v870 = vld [vmem:[#allocation5 + $0x1980] sm:$0xff]
    %v871 = vld [vmem:[#allocation5 + $0x1988] sm:$0xff]
    %v872 = vld [vmem:[#allocation5 + $0x1990] sm:$0xff]
    %v873 = vld [vmem:[#allocation5 + $0x1998] sm:$0xff]
    %v874 = vld [vmem:[#allocation5 + $0x19a0] sm:$0xff]
    %v875 = vld [vmem:[#allocation5 + $0x19a8] sm:$0xff]
    %v876 = vld [vmem:[#allocation5 + $0x19b0] sm:$0xff]
    %v877 = vld [vmem:[#allocation5 + $0x19b8] sm:$0xff]
    %v878 = vld [vmem:[#allocation5 + $0x19c0] sm:$0xff]
    %v879 = vld [vmem:[#allocation5 + $0x19c8] sm:$0xff]
    %v880 = vld [vmem:[#allocation5 + $0x19d0] sm:$0xff]
    %v881 = vld [vmem:[#allocation5 + $0x19d8] sm:$0xff]
    %v882 = vld [vmem:[#allocation5 + $0x19e0] sm:$0xff]
    %v883 = vld [vmem:[#allocation5 + $0x19e8] sm:$0xff]
    %v884 = vld [vmem:[#allocation5 + $0x19f0] sm:$0xff]
    %v885 = vld [vmem:[#allocation5 + $0x19f8] sm:$0xff]
    %v886 = vld [vmem:[#allocation5 + $0x1a00] sm:$0xff]
    %v887 = vld [vmem:[#allocation5 + $0x1a08] sm:$0xff]
    %v888 = vld [vmem:[#allocation5 + $0x1a10] sm:$0xff]
    %v889 = vld [vmem:[#allocation5 + $0x1a18] sm:$0xff]
    %v890 = vld [vmem:[#allocation5 + $0x1a20] sm:$0xff]
    %v891 = vld [vmem:[#allocation5 + $0x1a28] sm:$0xff]
    %v892 = vld [vmem:[#allocation5 + $0x1a30] sm:$0xff]
    %v893 = vld [vmem:[#allocation5 + $0x1a38] sm:$0xff]
    %v894 = vld [vmem:[#allocation5 + $0x1a40] sm:$0xff]
    %v895 = vld [vmem:[#allocation5 + $0x1a48] sm:$0xff]
    %v896 = vld [vmem:[#allocation5 + $0x1a50] sm:$0xff]
    %v897 = vld [vmem:[#allocation5 + $0x1a58] sm:$0xff]
    %v898 = vld [vmem:[#allocation5 + $0x1a60] sm:$0xff]
    %v899 = vld [vmem:[#allocation5 + $0x1a68] sm:$0xff]
    %v900 = vld [vmem:[#allocation5 + $0x1a70] sm:$0xff]
    %v901 = vld [vmem:[#allocation5 + $0x1a78] sm:$0xff]
    %v902 = vld [vmem:[#allocation5 + $0x1a80] sm:$0xff]
    %v903 = vld [vmem:[#allocation5 + $0x1a88] sm:$0xff]
    %v904 = vld [vmem:[#allocation5 + $0x1a90] sm:$0xff]
    %v905 = vld [vmem:[#allocation5 + $0x1a98] sm:$0xff]
    %v906 = vld [vmem:[#allocation5 + $0x1aa0] sm:$0xff]
    %v907 = vld [vmem:[#allocation5 + $0x1aa8] sm:$0xff]
    %v908 = vld [vmem:[#allocation5 + $0x1ab0] sm:$0xff]
    %v909 = vld [vmem:[#allocation5 + $0x1ab8] sm:$0xff]
    %v910 = vld [vmem:[#allocation5 + $0x1ac0] sm:$0xff]
    %v911 = vld [vmem:[#allocation5 + $0x1ac8] sm:$0xff]
    %v912 = vld [vmem:[#allocation5 + $0x1ad0] sm:$0xff]
    %v913 = vld [vmem:[#allocation5 + $0x1ad8] sm:$0xff]
    %v914 = vld [vmem:[#allocation5 + $0x1ae0] sm:$0xff]
    %v915 = vld [vmem:[#allocation5 + $0x1ae8] sm:$0xff]
    %v916 = vld [vmem:[#allocation5 + $0x1af0] sm:$0xff]
    %v917 = vld [vmem:[#allocation5 + $0x1af8] sm:$0xff]
    %v918 = vld [vmem:[#allocation5 + $0x1b00] sm:$0xff]
    %v919 = vld [vmem:[#allocation5 + $0x1b08] sm:$0xff]
    %v920 = vld [vmem:[#allocation5 + $0x1b10] sm:$0xff]
    %v921 = vld [vmem:[#allocation5 + $0x1b18] sm:$0xff]
    %v922 = vld [vmem:[#allocation5 + $0x1b20] sm:$0xff]
    %v923 = vld [vmem:[#allocation5 + $0x1b28] sm:$0xff]
    %v924 = vld [vmem:[#allocation5 + $0x1b30] sm:$0xff]
    %v925 = vld [vmem:[#allocation5 + $0x1b38] sm:$0xff]
    %v926 = vld [vmem:[#allocation5 + $0x1b40] sm:$0xff]
    %v927 = vld [vmem:[#allocation5 + $0x1b48] sm:$0xff]
    %v928 = vld [vmem:[#allocation5 + $0x1b50] sm:$0xff]
    %v929 = vld [vmem:[#allocation5 + $0x1b58] sm:$0xff]
    %v930 = vld [vmem:[#allocation5 + $0x1b60] sm:$0xff]
    %v931 = vld [vmem:[#allocation5 + $0x1b68] sm:$0xff]
    %v932 = vld [vmem:[#allocation5 + $0x1b70] sm:$0xff]
    %v933 = vld [vmem:[#allocation5 + $0x1b78] sm:$0xff]
    %v934 = vld [vmem:[#allocation5 + $0x1b80] sm:$0xff]
    %v935 = vld [vmem:[#allocation5 + $0x1b88] sm:$0xff]
    %v936 = vld [vmem:[#allocation5 + $0x1b90] sm:$0xff]
    %v937 = vld [vmem:[#allocation5 + $0x1b98] sm:$0xff]
    %v938 = vld [vmem:[#allocation5 + $0x1ba0] sm:$0xff]
    %v939 = vld [vmem:[#allocation5 + $0x1ba8] sm:$0xff]
    %v940 = vld [vmem:[#allocation5 + $0x1bb0] sm:$0xff]
    %v941 = vld [vmem:[#allocation5 + $0x1bb8] sm:$0xff]
    %v942 = vld [vmem:[#allocation5 + $0x1bc0] sm:$0xff]
    %v943 = vld [vmem:[#allocation5 + $0x1bc8] sm:$0xff]
    %v944 = vld [vmem:[#allocation5 + $0x1bd0] sm:$0xff]
    %v945 = vld [vmem:[#allocation5 + $0x1bd8] sm:$0xff]
    %v946 = vld [vmem:[#allocation5 + $0x1be0] sm:$0xff]
    %v947 = vld [vmem:[#allocation5 + $0x1be8] sm:$0xff]
    %v948 = vld [vmem:[#allocation5 + $0x1bf0] sm:$0xff]
    %v949 = vld [vmem:[#allocation5 + $0x1bf8] sm:$0xff]
    %v950 = vld [vmem:[#allocation5 + $0x1c00] sm:$0xff]
    %v951 = vld [vmem:[#allocation5 + $0x1c08] sm:$0xff]
    %v952 = vld [vmem:[#allocation5 + $0x1c10] sm:$0xff]
    %v953 = vld [vmem:[#allocation5 + $0x1c18] sm:$0xff]
    %v954 = vld [vmem:[#allocation5 + $0x1c20] sm:$0xff]
    %v955 = vld [vmem:[#allocation5 + $0x1c28] sm:$0xff]
    %v956 = vld [vmem:[#allocation5 + $0x1c30] sm:$0xff]
    %v957 = vld [vmem:[#allocation5 + $0x1c38] sm:$0xff]
    %v958 = vld [vmem:[#allocation5 + $0x1c40] sm:$0xff]
    %v959 = vld [vmem:[#allocation5 + $0x1c48] sm:$0xff]
    %v960 = vld [vmem:[#allocation5 + $0x1c50] sm:$0xff]
    %v961 = vld [vmem:[#allocation5 + $0x1c58] sm:$0xff]
    %v962 = vld [vmem:[#allocation5 + $0x1c60] sm:$0xff]
    %v963 = vld [vmem:[#allocation5 + $0x1c68] sm:$0xff]
    %v964 = vld [vmem:[#allocation5 + $0x1c70] sm:$0xff]
    %v965 = vld [vmem:[#allocation5 + $0x1c78] sm:$0xff]
    %v966 = vld [vmem:[#allocation5 + $0x1c80] sm:$0xff]
    %v967 = vld [vmem:[#allocation5 + $0x1c88] sm:$0xff]
    %v968 = vld [vmem:[#allocation5 + $0x1c90] sm:$0xff]
    %v969 = vld [vmem:[#allocation5 + $0x1c98] sm:$0xff]
    %v970 = vld [vmem:[#allocation5 + $0x1ca0] sm:$0xff]
    %v971 = vld [vmem:[#allocation5 + $0x1ca8] sm:$0xff]
    %v972 = vld [vmem:[#allocation5 + $0x1cb0] sm:$0xff]
    %v973 = vld [vmem:[#allocation5 + $0x1cb8] sm:$0xff]
    %v974 = vld [vmem:[#allocation5 + $0x1cc0] sm:$0xff]
    %v975 = vld [vmem:[#allocation5 + $0x1cc8] sm:$0xff]
    %v976 = vld [vmem:[#allocation5 + $0x1cd0] sm:$0xff]
    %v977 = vld [vmem:[#allocation5 + $0x1cd8] sm:$0xff]
    %v978 = vld [vmem:[#allocation5 + $0x1ce0] sm:$0xff]
    %v979 = vld [vmem:[#allocation5 + $0x1ce8] sm:$0xff]
    %v980 = vld [vmem:[#allocation5 + $0x1cf0] sm:$0xff]
    %v981 = vld [vmem:[#allocation5 + $0x1cf8] sm:$0xff]
    %v982 = vld [vmem:[#allocation5 + $0x1d00] sm:$0xff]
    %v983 = vld [vmem:[#allocation5 + $0x1d08] sm:$0xff]
    %v984 = vld [vmem:[#allocation5 + $0x1d10] sm:$0xff]
    %v985 = vld [vmem:[#allocation5 + $0x1d18] sm:$0xff]
    %v986 = vld [vmem:[#allocation5 + $0x1d20] sm:$0xff]
    %v987 = vld [vmem:[#allocation5 + $0x1d28] sm:$0xff]
    %v988 = vld [vmem:[#allocation5 + $0x1d30] sm:$0xff]
    %v989 = vld [vmem:[#allocation5 + $0x1d38] sm:$0xff]
    %v990 = vld [vmem:[#allocation5 + $0x1d40] sm:$0xff]
    %v991 = vld [vmem:[#allocation5 + $0x1d48] sm:$0xff]
    %v992 = vld [vmem:[#allocation5 + $0x1d50] sm:$0xff]
    %v993 = vld [vmem:[#allocation5 + $0x1d58] sm:$0xff]
    %v994 = vld [vmem:[#allocation5 + $0x1d60] sm:$0xff]
    %v995 = vld [vmem:[#allocation5 + $0x1d68] sm:$0xff]
    %v996 = vld [vmem:[#allocation5 + $0x1d70] sm:$0xff]
    %v997 = vld [vmem:[#allocation5 + $0x1d78] sm:$0xff]
    %v998 = vld [vmem:[#allocation5 + $0x1d80] sm:$0xff]
    %v999 = vld [vmem:[#allocation5 + $0x1d88] sm:$0xff]
    %v1000 = vld [vmem:[#allocation5 + $0x1d90] sm:$0xff]
    %v1001 = vld [vmem:[#allocation5 + $0x1d98] sm:$0xff]
    %v1002 = vld [vmem:[#allocation5 + $0x1da0] sm:$0xff]
    %v1003 = vld [vmem:[#allocation5 + $0x1da8] sm:$0xff]
    %v1004 = vld [vmem:[#allocation5 + $0x1db0] sm:$0xff]
    %v1005 = vld [vmem:[#allocation5 + $0x1db8] sm:$0xff]
    %v1006 = vld [vmem:[#allocation5 + $0x1dc0] sm:$0xff]
    %v1007 = vld [vmem:[#allocation5 + $0x1dc8] sm:$0xff]
    %v1008 = vld [vmem:[#allocation5 + $0x1dd0] sm:$0xff]
    %v1009 = vld [vmem:[#allocation5 + $0x1dd8] sm:$0xff]
    %v1010 = vld [vmem:[#allocation5 + $0x1de0] sm:$0xff]
    %v1011 = vld [vmem:[#allocation5 + $0x1de8] sm:$0xff]
    %v1012 = vld [vmem:[#allocation5 + $0x1df0] sm:$0xff]
    %v1013 = vld [vmem:[#allocation5 + $0x1df8] sm:$0xff]
    %v1014 = vld [vmem:[#allocation5 + $0x1e00] sm:$0xff]
    %v1015 = vld [vmem:[#allocation5 + $0x1e08] sm:$0xff]
    %v1016 = vld [vmem:[#allocation5 + $0x1e10] sm:$0xff]
    %v1017 = vld [vmem:[#allocation5 + $0x1e18] sm:$0xff]
    %v1018 = vld [vmem:[#allocation5 + $0x1e20] sm:$0xff]
    %v1019 = vld [vmem:[#allocation5 + $0x1e28] sm:$0xff]
    %v1020 = vld [vmem:[#allocation5 + $0x1e30] sm:$0xff]
    %v1021 = vld [vmem:[#allocation5 + $0x1e38] sm:$0xff]
    %v1022 = vld [vmem:[#allocation5 + $0x1e40] sm:$0xff]
    %v1023 = vld [vmem:[#allocation5 + $0x1e48] sm:$0xff]
    %v1024 = vld [vmem:[#allocation5 + $0x1e50] sm:$0xff]
    %v1025 = vld [vmem:[#allocation5 + $0x1e58] sm:$0xff]
    %v1026 = vld [vmem:[#allocation5 + $0x1e60] sm:$0xff]
    %v1027 = vld [vmem:[#allocation5 + $0x1e68] sm:$0xff]
    %v1028 = vld [vmem:[#allocation5 + $0x1e70] sm:$0xff]
    %v1029 = vld [vmem:[#allocation5 + $0x1e78] sm:$0xff]
    %v1030 = vld [vmem:[#allocation5 + $0x1e80] sm:$0xff]
    %v1031 = vld [vmem:[#allocation5 + $0x1e88] sm:$0xff]
    %v1032 = vld [vmem:[#allocation5 + $0x1e90] sm:$0xff]
    %v1033 = vld [vmem:[#allocation5 + $0x1e98] sm:$0xff]
    %v1034 = vld [vmem:[#allocation5 + $0x1ea0] sm:$0xff]
    %v1035 = vld [vmem:[#allocation5 + $0x1ea8] sm:$0xff]
    %v1036 = vld [vmem:[#allocation5 + $0x1eb0] sm:$0xff]
    %v1037 = vld [vmem:[#allocation5 + $0x1eb8] sm:$0xff]
    %v1038 = vld [vmem:[#allocation5 + $0x1ec0] sm:$0xff]
    %v1039 = vld [vmem:[#allocation5 + $0x1ec8] sm:$0xff]
    %v1040 = vld [vmem:[#allocation5 + $0x1ed0] sm:$0xff]
    %v1041 = vld [vmem:[#allocation5 + $0x1ed8] sm:$0xff]
    %v1042 = vld [vmem:[#allocation5 + $0x1ee0] sm:$0xff]
    %v1043 = vld [vmem:[#allocation5 + $0x1ee8] sm:$0xff]
    %v1044 = vld [vmem:[#allocation5 + $0x1ef0] sm:$0xff]
    %v1045 = vld [vmem:[#allocation5 + $0x1ef8] sm:$0xff]
    %v1046 = vld [vmem:[#allocation5 + $0x1f00] sm:$0xff]
    %v1047 = vld [vmem:[#allocation5 + $0x1f08] sm:$0xff]
    %v1048 = vld [vmem:[#allocation5 + $0x1f10] sm:$0xff]
    %v1049 = vld [vmem:[#allocation5 + $0x1f18] sm:$0xff]
    %v1050 = vld [vmem:[#allocation5 + $0x1f20] sm:$0xff]
    %v1051 = vld [vmem:[#allocation5 + $0x1f28] sm:$0xff]
    %v1052 = vld [vmem:[#allocation5 + $0x1f30] sm:$0xff]
    %v1053 = vld [vmem:[#allocation5 + $0x1f38] sm:$0xff]
    %v1054 = vld [vmem:[#allocation5 + $0x1f40] sm:$0xff]
    %v1055 = vld [vmem:[#allocation5 + $0x1f48] sm:$0xff]
    %v1056 = vld [vmem:[#allocation5 + $0x1f50] sm:$0xff]
    %v1057 = vld [vmem:[#allocation5 + $0x1f58] sm:$0xff]
    %v1058 = vld [vmem:[#allocation5 + $0x1f60] sm:$0xff]
    %v1059 = vld [vmem:[#allocation5 + $0x1f68] sm:$0xff]
    %v1060 = vld [vmem:[#allocation5 + $0x1f70] sm:$0xff]
    %v1061 = vld [vmem:[#allocation5 + $0x1f78] sm:$0xff]
    %v1062 = vld [vmem:[#allocation5 + $0x1f80] sm:$0xff]
    %v1063 = vld [vmem:[#allocation5 + $0x1f88] sm:$0xff]
    %v1064 = vld [vmem:[#allocation5 + $0x1f90] sm:$0xff]
    %v1065 = vld [vmem:[#allocation5 + $0x1f98] sm:$0xff]
    %v1066 = vld [vmem:[#allocation5 + $0x1fa0] sm:$0xff]
    %v1067 = vld [vmem:[#allocation5 + $0x1fa8] sm:$0xff]
    %v1068 = vld [vmem:[#allocation5 + $0x1fb0] sm:$0xff]
    %v1069 = vld [vmem:[#allocation5 + $0x1fb8] sm:$0xff]
    %v1070 = vld [vmem:[#allocation5 + $0x1fc0] sm:$0xff]
    %v1071 = vld [vmem:[#allocation5 + $0x1fc8] sm:$0xff]
    %v1072 = vld [vmem:[#allocation5 + $0x1fd0] sm:$0xff]
    %v1073 = vld [vmem:[#allocation5 + $0x1fd8] sm:$0xff]
    %v1074 = vld [vmem:[#allocation5 + $0x1fe0] sm:$0xff]
    %v1075 = vld [vmem:[#allocation5 + $0x1fe8] sm:$0xff]
    %v1076 = vld [vmem:[#allocation5 + $0x1ff0] sm:$0xff]
    %v1077 = vld [vmem:[#allocation5 + $0x1ff8] sm:$0xff]
    %v1078 = vld [vmem:[#allocation7] sm:$0xff]
    %v1080 = vlaneseq
    %v1081 = vshrl.u32 %v1080, 7
    %v1082 = vsub.s32 0, %v1081
    %v1083 = vrot.slane %v1078, %v1082
    %v1084 = vlaneseq
    %v1085 = vshrl.u32 %v1084, 7
    %v1086 = vsub.s32 1, %v1085
    %v1087 = vrot.slane %v1078, %v1086
    %v1088 = vlaneseq
    %v1089 = vshrl.u32 %v1088, 7
    %v1090 = vsub.s32 2, %v1089
    %v1091 = vrot.slane %v1078, %v1090
    %v1092 = vlaneseq
    %v1093 = vshrl.u32 %v1092, 7
    %v1094 = vsub.s32 3, %v1093
    %v1095 = vrot.slane %v1078, %v1094
    %v1096 = vlaneseq
    %v1097 = vshrl.u32 %v1096, 7
    %v1098 = vsub.s32 4, %v1097
    %v1099 = vrot.slane %v1078, %v1098
    %v1100 = vlaneseq
    %v1101 = vshrl.u32 %v1100, 7
    %v1102 = vsub.s32 5, %v1101
    %v1103 = vrot.slane %v1078, %v1102
    %v1104 = vlaneseq
    %v1105 = vshrl.u32 %v1104, 7
    %v1106 = vsub.s32 6, %v1105
    %v1107 = vrot.slane %v1078, %v1106
    %v1108 = vlaneseq
    %v1109 = vshrl.u32 %v1108, 7
    %v1110 = vsub.s32 7, %v1109
    %v1111 = vrot.slane %v1078, %v1110
    %v1122 = vcombine.high %v52, %v52
    %v1124 = vunpack.c.l.s4 1983009808
    %v1125 = vunpack.c.0.s8 %v1124
    %v1126 = vlaneseq
    %v1127 = vshrl.u32 %v1126, 7
    %v1128 = vsub.s32 %v1125, %v1127
    %v1129 = vrot.slane %v52, %v1128
    %v1131 = vunpack.c.l.s4 1983009808
    %v1132 = vunpack.c.0.s8 %v1131
    %v1133 = vlaneseq
    %v1134 = vshrl.u32 %v1133, 7
    %v1135 = vsub.s32 %v1132, %v1134
    %v1136 = vrot.slane %v1122, %v1135
    %v1137 = vcombine.high %v1129, %v1129
    %v1138 = vcombine.high %v1136, %v1136
    %v1139 = vcombine.high %v53, %v53
    %v1141 = vunpack.c.l.s4 1983009808
    %v1142 = vunpack.c.0.s8 %v1141
    %v1143 = vlaneseq
    %v1144 = vshrl.u32 %v1143, 7
    %v1145 = vsub.s32 %v1142, %v1144
    %v1146 = vrot.slane %v53, %v1145
    %v1148 = vunpack.c.l.s4 1983009808
    %v1149 = vunpack.c.0.s8 %v1148
    %v1150 = vlaneseq
    %v1151 = vshrl.u32 %v1150, 7
    %v1152 = vsub.s32 %v1149, %v1151
    %v1153 = vrot.slane %v1139, %v1152
    %v1154 = vcombine.high %v1146, %v1146
    %v1155 = vcombine.high %v1153, %v1153
    %1164 = vmatprep.subr.mxu0 %v55
    %1165 = vmatpush1.msra.mxu0 %v54
    %1166 = vmatprep.subr.mxu0 %v63
    %1167 = vmatpush1.msra.mxu0 %v62
    %1168 = vmatprep.subr.mxu0 %v71
    %1169 = vmatpush1.msra.mxu0 %v70
    %1170 = vmatprep.subr.mxu0 %v79
    %1171 = vmatpush1.msra.mxu0 %v78
    %1172 = vmatprep.subr.mxu0 %v87
    %1173 = vmatpush1.msra.mxu0 %v86
    %1174 = vmatprep.subr.mxu0 %v95
    %1175 = vmatpush1.msra.mxu0 %v94
    %1176 = vmatprep.subr.mxu0 %v103
    %1177 = vmatpush1.msra.mxu0 %v102
    %1178 = vmatprep.subr.mxu0 %v111
    %1179 = vmatpush1.msra.mxu0 %v110
    %1180 = vmatprep.subr.mxu0 %v119
    %1181 = vmatpush1.msra.mxu0 %v118
    %1182 = vmatprep.subr.mxu0 %v127
    %1183 = vmatpush1.msra.mxu0 %v126
    %1184 = vmatprep.subr.mxu0 %v135
    %1185 = vmatpush1.msra.mxu0 %v134
    %1186 = vmatprep.subr.mxu0 %v143
    %1187 = vmatpush1.msra.mxu0 %v142
    %1188 = vmatprep.subr.mxu0 %v151
    %1189 = vmatpush1.msra.mxu0 %v150
    %1190 = vmatprep.subr.mxu0 %v159
    %1191 = vmatpush1.msra.mxu0 %v158
    %1192 = vmatprep.subr.mxu0 %v167
    %1193 = vmatpush1.msra.mxu0 %v166
    %1194 = vmatprep.subr.mxu0 %v175
    %1195 = vmatpush1.msra.mxu0 %v174
    %1196 = vmatprep.subr.mxu0 %v183
    %1197 = vmatpush1.msra.mxu0 %v182
    %1198 = vmatprep.subr.mxu0 %v191
    %1199 = vmatpush1.msra.mxu0 %v190
    %1200 = vmatprep.subr.mxu0 %v199
    %1201 = vmatpush1.msra.mxu0 %v198
    %1202 = vmatprep.subr.mxu0 %v207
    %1203 = vmatpush1.msra.mxu0 %v206
    %1204 = vmatprep.subr.mxu0 %v215
    %1205 = vmatpush1.msra.mxu0 %v214
    %1206 = vmatprep.subr.mxu0 %v223
    %1207 = vmatpush1.msra.mxu0 %v222
    %1208 = vmatprep.subr.mxu0 %v231
    %1209 = vmatpush1.msra.mxu0 %v230
    %1210 = vmatprep.subr.mxu0 %v239
    %1211 = vmatpush1.msra.mxu0 %v238
    %1212 = vmatprep.subr.mxu0 %v247
    %1213 = vmatpush1.msra.mxu0 %v246
    %1214 = vmatprep.subr.mxu0 %v255
    %1215 = vmatpush1.msra.mxu0 %v254
    %1216 = vmatprep.subr.mxu0 %v263
    %1217 = vmatpush1.msra.mxu0 %v262
    %1218 = vmatprep.subr.mxu0 %v271
    %1219 = vmatpush1.msra.mxu0 %v270
    %1220 = vmatprep.subr.mxu0 %v279
    %1221 = vmatpush1.msra.mxu0 %v278
    %1222 = vmatprep.subr.mxu0 %v287
    %1223 = vmatpush1.msra.mxu0 %v286
    %1224 = vmatprep.subr.mxu0 %v295
    %1225 = vmatpush1.msra.mxu0 %v294
    %1226 = vmatprep.subr.mxu0 %v303
    %1227 = vmatpush1.msra.mxu0 %v302
    %1228 = vmatprep.mubr.f32.mxu0 %v1137
    %1229 = vmatmul.mubr.f32.gmra.mrb[0].mxu0 %v1129
    %v1230 = vpop.f32.mrb[0].mxu0
    %v1231 = vadd.f32 %v1083, %v1230
    %v1232 = vpop.f32.mrb[0].mxu0
    %v1233 = vadd.f32 %v1087, %v1232
    %1234 = vdwg.mxu0
    %1235 = vmatprep.subr.mxu0 %v311
    %1236 = vmatpush1.msra.mxu0 %v310
    %1237 = vmatprep.subr.mxu0 %v319
    %1238 = vmatpush1.msra.mxu0 %v318
    %1239 = vmatprep.subr.mxu0 %v327
    %1240 = vmatpush1.msra.mxu0 %v326
    %1241 = vmatprep.subr.mxu0 %v335
    %1242 = vmatpush1.msra.mxu0 %v334
    %1243 = vmatprep.subr.mxu0 %v343
    %1244 = vmatpush1.msra.mxu0 %v342
    %1245 = vmatprep.subr.mxu0 %v351
    %1246 = vmatpush1.msra.mxu0 %v350
    %1247 = vmatprep.subr.mxu0 %v359
    %1248 = vmatpush1.msra.mxu0 %v358
    %1249 = vmatprep.subr.mxu0 %v367
    %1250 = vmatpush1.msra.mxu0 %v366
    %1251 = vmatprep.subr.mxu0 %v375
    %1252 = vmatpush1.msra.mxu0 %v374
    %1253 = vmatprep.subr.mxu0 %v383
    %1254 = vmatpush1.msra.mxu0 %v382
    %1255 = vmatprep.subr.mxu0 %v391
    %1256 = vmatpush1.msra.mxu0 %v390
    %1257 = vmatprep.subr.mxu0 %v399
    %1258 = vmatpush1.msra.mxu0 %v398
    %1259 = vmatprep.subr.mxu0 %v407
    %1260 = vmatpush1.msra.mxu0 %v406
    %1261 = vmatprep.subr.mxu0 %v415
    %1262 = vmatpush1.msra.mxu0 %v414
    %1263 = vmatprep.subr.mxu0 %v423
    %1264 = vmatpush1.msra.mxu0 %v422
    %1265 = vmatprep.subr.mxu0 %v431
    %1266 = vmatpush1.msra.mxu0 %v430
    %1267 = vmatprep.subr.mxu0 %v439
    %1268 = vmatpush1.msra.mxu0 %v438
    %1269 = vmatprep.subr.mxu0 %v447
    %1270 = vmatpush1.msra.mxu0 %v446
    %1271 = vmatprep.subr.mxu0 %v455
    %1272 = vmatpush1.msra.mxu0 %v454
    %1273 = vmatprep.subr.mxu0 %v463
    %1274 = vmatpush1.msra.mxu0 %v462
    %1275 = vmatprep.subr.mxu0 %v471
    %1276 = vmatpush1.msra.mxu0 %v470
    %1277 = vmatprep.subr.mxu0 %v479
    %1278 = vmatpush1.msra.mxu0 %v478
    %1279 = vmatprep.subr.mxu0 %v487
    %1280 = vmatpush1.msra.mxu0 %v486
    %1281 = vmatprep.subr.mxu0 %v495
    %1282 = vmatpush1.msra.mxu0 %v494
    %1283 = vmatprep.subr.mxu0 %v503
    %1284 = vmatpush1.msra.mxu0 %v502
    %1285 = vmatprep.subr.mxu0 %v511
    %1286 = vmatpush1.msra.mxu0 %v510
    %1287 = vmatprep.subr.mxu0 %v519
    %1288 = vmatpush1.msra.mxu0 %v518
    %1289 = vmatprep.subr.mxu0 %v527
    %1290 = vmatpush1.msra.mxu0 %v526
    %1291 = vmatprep.subr.mxu0 %v535
    %1292 = vmatpush1.msra.mxu0 %v534
    %1293 = vmatprep.subr.mxu0 %v543
    %1294 = vmatpush1.msra.mxu0 %v542
    %1295 = vmatprep.subr.mxu0 %v551
    %1296 = vmatpush1.msra.mxu0 %v550
    %1297 = vmatprep.subr.mxu0 %v559
    %1298 = vmatpush1.msra.mxu0 %v558
    %1299 = vmatprep.mubr.f32.mxu0 %v1138
    %1300 = vmatmul.mubr.f32.gmra.mrb[0].mxu0 %v1136
    %v1301 = vpop.f32.mrb[0].mxu0
    %v1302 = vadd.f32 %v1231, %v1301
    %v1303 = vpop.f32.mrb[0].mxu0
    %v1304 = vadd.f32 %v1233, %v1303
    %1305 = vdwg.mxu0
    %1306 = vmatprep.subr.mxu0 %v567
    %1307 = vmatpush1.msra.mxu0 %v566
    %1308 = vmatprep.subr.mxu0 %v575
    %1309 = vmatpush1.msra.mxu0 %v574
    %1310 = vmatprep.subr.mxu0 %v583
    %1311 = vmatpush1.msra.mxu0 %v582
    %1312 = vmatprep.subr.mxu0 %v591
    %1313 = vmatpush1.msra.mxu0 %v590
    %1314 = vmatprep.subr.mxu0 %v599
    %1315 = vmatpush1.msra.mxu0 %v598
    %1316 = vmatprep.subr.mxu0 %v607
    %1317 = vmatpush1.msra.mxu0 %v606
    %1318 = vmatprep.subr.mxu0 %v615
    %1319 = vmatpush1.msra.mxu0 %v614
    %1320 = vmatprep.subr.mxu0 %v623
    %1321 = vmatpush1.msra.mxu0 %v622
    %1322 = vmatprep.subr.mxu0 %v631
    %1323 = vmatpush1.msra.mxu0 %v630
    %1324 = vmatprep.subr.mxu0 %v639
    %1325 = vmatpush1.msra.mxu0 %v638
    %1326 = vmatprep.subr.mxu0 %v647
    %1327 = vmatpush1.msra.mxu0 %v646
    %1328 = vmatprep.subr.mxu0 %v655
    %1329 = vmatpush1.msra.mxu0 %v654
    %1330 = vmatprep.subr.mxu0 %v663
    %1331 = vmatpush1.msra.mxu0 %v662
    %1332 = vmatprep.subr.mxu0 %v671
    %1333 = vmatpush1.msra.mxu0 %v670
    %1334 = vmatprep.subr.mxu0 %v679
    %1335 = vmatpush1.msra.mxu0 %v678
    %1336 = vmatprep.subr.mxu0 %v687
    %1337 = vmatpush1.msra.mxu0 %v686
    %1338 = vmatprep.subr.mxu0 %v695
    %1339 = vmatpush1.msra.mxu0 %v694
    %1340 = vmatprep.subr.mxu0 %v703
    %1341 = vmatpush1.msra.mxu0 %v702
    %1342 = vmatprep.subr.mxu0 %v711
    %1343 = vmatpush1.msra.mxu0 %v710
    %1344 = vmatprep.subr.mxu0 %v719
    %1345 = vmatpush1.msra.mxu0 %v718
    %1346 = vmatprep.subr.mxu0 %v727
    %1347 = vmatpush1.msra.mxu0 %v726
    %1348 = vmatprep.subr.mxu0 %v735
    %1349 = vmatpush1.msra.mxu0 %v734
    %1350 = vmatprep.subr.mxu0 %v743
    %1351 = vmatpush1.msra.mxu0 %v742
    %1352 = vmatprep.subr.mxu0 %v751
    %1353 = vmatpush1.msra.mxu0 %v750
    %1354 = vmatprep.subr.mxu0 %v759
    %1355 = vmatpush1.msra.mxu0 %v758
    %1356 = vmatprep.subr.mxu0 %v767
    %1357 = vmatpush1.msra.mxu0 %v766
    %1358 = vmatprep.subr.mxu0 %v775
    %1359 = vmatpush1.msra.mxu0 %v774
    %1360 = vmatprep.subr.mxu0 %v783
    %1361 = vmatpush1.msra.mxu0 %v782
    %1362 = vmatprep.subr.mxu0 %v791
    %1363 = vmatpush1.msra.mxu0 %v790
    %1364 = vmatprep.subr.mxu0 %v799
    %1365 = vmatpush1.msra.mxu0 %v798
    %1366 = vmatprep.subr.mxu0 %v807
    %1367 = vmatpush1.msra.mxu0 %v806
    %1368 = vmatprep.subr.mxu0 %v815
    %1369 = vmatpush1.msra.mxu0 %v814
    %1370 = vmatprep.mubr.f32.mxu0 %v1154
    %1371 = vmatmul.mubr.f32.gmra.mrb[0].mxu0 %v1146
    %v1372 = vpop.f32.mrb[0].mxu0
    %v1373 = vadd.f32 %v1302, %v1372
    %v1374 = vpop.f32.mrb[0].mxu0
    %v1375 = vadd.f32 %v1304, %v1374
    %1376 = vdwg.mxu0
    %1377 = vmatprep.subr.mxu0 %v823
    %1378 = vmatpush1.msra.mxu0 %v822
    %1379 = vmatprep.subr.mxu0 %v831
    %1380 = vmatpush1.msra.mxu0 %v830
    %1381 = vmatprep.subr.mxu0 %v839
    %1382 = vmatpush1.msra.mxu0 %v838
    %1383 = vmatprep.subr.mxu0 %v847
    %1384 = vmatpush1.msra.mxu0 %v846
    %1385 = vmatprep.subr.mxu0 %v855
    %1386 = vmatpush1.msra.mxu0 %v854
    %1387 = vmatprep.subr.mxu0 %v863
    %1388 = vmatpush1.msra.mxu0 %v862
    %1389 = vmatprep.subr.mxu0 %v871
    %1390 = vmatpush1.msra.mxu0 %v870
    %1391 = vmatprep.subr.mxu0 %v879
    %1392 = vmatpush1.msra.mxu0 %v878
    %1393 = vmatprep.subr.mxu0 %v887
    %1394 = vmatpush1.msra.mxu0 %v886
    %1395 = vmatprep.subr.mxu0 %v895
    %1396 = vmatpush1.msra.mxu0 %v894
    %1397 = vmatprep.subr.mxu0 %v903
    %1398 = vmatpush1.msra.mxu0 %v902
    %1399 = vmatprep.subr.mxu0 %v911
    %1400 = vmatpush1.msra.mxu0 %v910
    %1401 = vmatprep.subr.mxu0 %v919
    %1402 = vmatpush1.msra.mxu0 %v918
    %1403 = vmatprep.subr.mxu0 %v927
    %1404 = vmatpush1.msra.mxu0 %v926
    %1405 = vmatprep.subr.mxu0 %v935
    %1406 = vmatpush1.msra.mxu0 %v934
    %1407 = vmatprep.subr.mxu0 %v943
    %1408 = vmatpush1.msra.mxu0 %v942
    %1409 = vmatprep.subr.mxu0 %v951
    %1410 = vmatpush1.msra.mxu0 %v950
    %1411 = vmatprep.subr.mxu0 %v959
    %1412 = vmatpush1.msra.mxu0 %v958
    %1413 = vmatprep.subr.mxu0 %v967
    %1414 = vmatpush1.msra.mxu0 %v966
    %1415 = vmatprep.subr.mxu0 %v975
    %1416 = vmatpush1.msra.mxu0 %v974
    %1417 = vmatprep.subr.mxu0 %v983
    %1418 = vmatpush1.msra.mxu0 %v982
    %1419 = vmatprep.subr.mxu0 %v991
    %1420 = vmatpush1.msra.mxu0 %v990
    %1421 = vmatprep.subr.mxu0 %v999
    %1422 = vmatpush1.msra.mxu0 %v998
    %1423 = vmatprep.subr.mxu0 %v1007
    %1424 = vmatpush1.msra.mxu0 %v1006
    %1425 = vmatprep.subr.mxu0 %v1015
    %1426 = vmatpush1.msra.mxu0 %v1014
    %1427 = vmatprep.subr.mxu0 %v1023
    %1428 = vmatpush1.msra.mxu0 %v1022
    %1429 = vmatprep.subr.mxu0 %v1031
    %1430 = vmatpush1.msra.mxu0 %v1030
    %1431 = vmatprep.subr.mxu0 %v1039
    %1432 = vmatpush1.msra.mxu0 %v1038
    %1433 = vmatprep.subr.mxu0 %v1047
    %1434 = vmatpush1.msra.mxu0 %v1046
    %1435 = vmatprep.subr.mxu0 %v1055
    %1436 = vmatpush1.msra.mxu0 %v1054
    %1437 = vmatprep.subr.mxu0 %v1063
    %1438 = vmatpush1.msra.mxu0 %v1062
    %1439 = vmatprep.subr.mxu0 %v1071
    %1440 = vmatpush1.msra.mxu0 %v1070
    %1441 = vmatprep.mubr.f32.mxu0 %v1155
    %1442 = vmatmul.mubr.f32.gmra.mrb[0].mxu0 %v1153
    %v1443 = vpop.f32.mrb[0].mxu0
    %v1444 = vadd.f32 %v1373, %v1443
    %v1445 = vpop.f32.mrb[0].mxu0
    %v1446 = vadd.f32 %v1375, %v1445
    %1447 = vdwg.mxu0
    %1448 = vmatprep.subr.mxu0 %v57
    %1449 = vmatpush1.msra.mxu0 %v56
    %1450 = vmatprep.subr.mxu0 %v65
    %1451 = vmatpush1.msra.mxu0 %v64
    %1452 = vmatprep.subr.mxu0 %v73
    %1453 = vmatpush1.msra.mxu0 %v72
    %1454 = vmatprep.subr.mxu0 %v81
    %1455 = vmatpush1.msra.mxu0 %v80
    %1456 = vmatprep.subr.mxu0 %v89
    %1457 = vmatpush1.msra.mxu0 %v88
    %1458 = vmatprep.subr.mxu0 %v97
    %1459 = vmatpush1.msra.mxu0 %v96
    %1460 = vmatprep.subr.mxu0 %v105
    %1461 = vmatpush1.msra.mxu0 %v104
    %1462 = vmatprep.subr.mxu0 %v113
    %1463 = vmatpush1.msra.mxu0 %v112
    %1464 = vmatprep.subr.mxu0 %v121
    %1465 = vmatpush1.msra.mxu0 %v120
    %1466 = vmatprep.subr.mxu0 %v129
    %1467 = vmatpush1.msra.mxu0 %v128
    %1468 = vmatprep.subr.mxu0 %v137
    %1469 = vmatpush1.msra.mxu0 %v136
    %1470 = vmatprep.subr.mxu0 %v145
    %1471 = vmatpush1.msra.mxu0 %v144
    %1472 = vmatprep.subr.mxu0 %v153
    %1473 = vmatpush1.msra.mxu0 %v152
    %1474 = vmatprep.subr.mxu0 %v161
    %1475 = vmatpush1.msra.mxu0 %v160
    %1476 = vmatprep.subr.mxu0 %v169
    %1477 = vmatpush1.msra.mxu0 %v168
    %1478 = vmatprep.subr.mxu0 %v177
    %1479 = vmatpush1.msra.mxu0 %v176
    %1480 = vmatprep.subr.mxu0 %v185
    %1481 = vmatpush1.msra.mxu0 %v184
    %1482 = vmatprep.subr.mxu0 %v193
    %1483 = vmatpush1.msra.mxu0 %v192
    %1484 = vmatprep.subr.mxu0 %v201
    %1485 = vmatpush1.msra.mxu0 %v200
    %1486 = vmatprep.subr.mxu0 %v209
    %1487 = vmatpush1.msra.mxu0 %v208
    %1488 = vmatprep.subr.mxu0 %v217
    %1489 = vmatpush1.msra.mxu0 %v216
    %1490 = vmatprep.subr.mxu0 %v225
    %1491 = vmatpush1.msra.mxu0 %v224
    %1492 = vmatprep.subr.mxu0 %v233
    %1493 = vmatpush1.msra.mxu0 %v232
    %1494 = vmatprep.subr.mxu0 %v241
    %1495 = vmatpush1.msra.mxu0 %v240
    %1496 = vmatprep.subr.mxu0 %v249
    %1497 = vmatpush1.msra.mxu0 %v248
    %1498 = vmatprep.subr.mxu0 %v257
    %1499 = vmatpush1.msra.mxu0 %v256
    %1500 = vmatprep.subr.mxu0 %v265
    %1501 = vmatpush1.msra.mxu0 %v264
    %1502 = vmatprep.subr.mxu0 %v273
    %1503 = vmatpush1.msra.mxu0 %v272
    %1504 = vmatprep.subr.mxu0 %v281
    %1505 = vmatpush1.msra.mxu0 %v280
    %1506 = vmatprep.subr.mxu0 %v289
    %1507 = vmatpush1.msra.mxu0 %v288
    %1508 = vmatprep.subr.mxu0 %v297
    %1509 = vmatpush1.msra.mxu0 %v296
    %1510 = vmatprep.subr.mxu0 %v305
    %1511 = vmatpush1.msra.mxu0 %v304
    %1512 = vmatprep.mubr.f32.mxu0 %v1137
    %1513 = vmatmul.mubr.f32.gmra.mrb[0].mxu0 %v1129
    %v1514 = vpop.f32.mrb[0].mxu0
    %v1515 = vadd.f32 %v1091, %v1514
    %v1516 = vpop.f32.mrb[0].mxu0
    %v1517 = vadd.f32 %v1095, %v1516
    %1518 = vdwg.mxu0
    %1519 = vmatprep.subr.mxu0 %v313
    %1520 = vmatpush1.msra.mxu0 %v312
    %1521 = vmatprep.subr.mxu0 %v321
    %1522 = vmatpush1.msra.mxu0 %v320
    %1523 = vmatprep.subr.mxu0 %v329
    %1524 = vmatpush1.msra.mxu0 %v328
    %1525 = vmatprep.subr.mxu0 %v337
    %1526 = vmatpush1.msra.mxu0 %v336
    %1527 = vmatprep.subr.mxu0 %v345
    %1528 = vmatpush1.msra.mxu0 %v344
    %1529 = vmatprep.subr.mxu0 %v353
    %1530 = vmatpush1.msra.mxu0 %v352
    %1531 = vmatprep.subr.mxu0 %v361
    %1532 = vmatpush1.msra.mxu0 %v360
    %1533 = vmatprep.subr.mxu0 %v369
    %1534 = vmatpush1.msra.mxu0 %v368
    %1535 = vmatprep.subr.mxu0 %v377
    %1536 = vmatpush1.msra.mxu0 %v376
    %1537 = vmatprep.subr.mxu0 %v385
    %1538 = vmatpush1.msra.mxu0 %v384
    %1539 = vmatprep.subr.mxu0 %v393
    %1540 = vmatpush1.msra.mxu0 %v392
    %1541 = vmatprep.subr.mxu0 %v401
    %1542 = vmatpush1.msra.mxu0 %v400
    %1543 = vmatprep.subr.mxu0 %v409
    %1544 = vmatpush1.msra.mxu0 %v408
    %1545 = vmatprep.subr.mxu0 %v417
    %1546 = vmatpush1.msra.mxu0 %v416
    %1547 = vmatprep.subr.mxu0 %v425
    %1548 = vmatpush1.msra.mxu0 %v424
    %1549 = vmatprep.subr.mxu0 %v433
    %1550 = vmatpush1.msra.mxu0 %v432
    %1551 = vmatprep.subr.mxu0 %v441
    %1552 = vmatpush1.msra.mxu0 %v440
    %1553 = vmatprep.subr.mxu0 %v449
    %1554 = vmatpush1.msra.mxu0 %v448
    %1555 = vmatprep.subr.mxu0 %v457
    %1556 = vmatpush1.msra.mxu0 %v456
    %1557 = vmatprep.subr.mxu0 %v465
    %1558 = vmatpush1.msra.mxu0 %v464
    %1559 = vmatprep.subr.mxu0 %v473
    %1560 = vmatpush1.msra.mxu0 %v472
    %1561 = vmatprep.subr.mxu0 %v481
    %1562 = vmatpush1.msra.mxu0 %v480
    %1563 = vmatprep.subr.mxu0 %v489
    %1564 = vmatpush1.msra.mxu0 %v488
    %1565 = vmatprep.subr.mxu0 %v497
    %1566 = vmatpush1.msra.mxu0 %v496
    %1567 = vmatprep.subr.mxu0 %v505
    %1568 = vmatpush1.msra.mxu0 %v504
    %1569 = vmatprep.subr.mxu0 %v513
    %1570 = vmatpush1.msra.mxu0 %v512
    %1571 = vmatprep.subr.mxu0 %v521
    %1572 = vmatpush1.msra.mxu0 %v520
    %1573 = vmatprep.subr.mxu0 %v529
    %1574 = vmatpush1.msra.mxu0 %v528
    %1575 = vmatprep.subr.mxu0 %v537
    %1576 = vmatpush1.msra.mxu0 %v536
    %1577 = vmatprep.subr.mxu0 %v545
    %1578 = vmatpush1.msra.mxu0 %v544
    %1579 = vmatprep.subr.mxu0 %v553
    %1580 = vmatpush1.msra.mxu0 %v552
    %1581 = vmatprep.subr.mxu0 %v561
    %1582 = vmatpush1.msra.mxu0 %v560
    %1583 = vmatprep.mubr.f32.mxu0 %v1138
    %1584 = vmatmul.mubr.f32.gmra.mrb[0].mxu0 %v1136
    %v1585 = vpop.f32.mrb[0].mxu0
    %v1586 = vadd.f32 %v1515, %v1585
    %v1587 = vpop.f32.mrb[0].mxu0
    %v1588 = vadd.f32 %v1517, %v1587
    %1589 = vdwg.mxu0
    %1590 = vmatprep.subr.mxu0 %v569
    %1591 = vmatpush1.msra.mxu0 %v568
    %1592 = vmatprep.subr.mxu0 %v577
    %1593 = vmatpush1.msra.mxu0 %v576
    %1594 = vmatprep.subr.mxu0 %v585
    %1595 = vmatpush1.msra.mxu0 %v584
    %1596 = vmatprep.subr.mxu0 %v593
    %1597 = vmatpush1.msra.mxu0 %v592
    %1598 = vmatprep.subr.mxu0 %v601
    %1599 = vmatpush1.msra.mxu0 %v600
    %1600 = vmatprep.subr.mxu0 %v609
    %1601 = vmatpush1.msra.mxu0 %v608
    %1602 = vmatprep.subr.mxu0 %v617
    %1603 = vmatpush1.msra.mxu0 %v616
    %1604 = vmatprep.subr.mxu0 %v625
    %1605 = vmatpush1.msra.mxu0 %v624
    %1606 = vmatprep.subr.mxu0 %v633
    %1607 = vmatpush1.msra.mxu0 %v632
    %1608 = vmatprep.subr.mxu0 %v641
    %1609 = vmatpush1.msra.mxu0 %v640
    %1610 = vmatprep.subr.mxu0 %v649
    %1611 = vmatpush1.msra.mxu0 %v648
    %1612 = vmatprep.subr.mxu0 %v657
    %1613 = vmatpush1.msra.mxu0 %v656
    %1614 = vmatprep.subr.mxu0 %v665
    %1615 = vmatpush1.msra.mxu0 %v664
    %1616 = vmatprep.subr.mxu0 %v673
    %1617 = vmatpush1.msra.mxu0 %v672
    %1618 = vmatprep.subr.mxu0 %v681
    %1619 = vmatpush1.msra.mxu0 %v680
    %1620 = vmatprep.subr.mxu0 %v689
    %1621 = vmatpush1.msra.mxu0 %v688
    %1622 = vmatprep.subr.mxu0 %v697
    %1623 = vmatpush1.msra.mxu0 %v696
    %1624 = vmatprep.subr.mxu0 %v705
    %1625 = vmatpush1.msra.mxu0 %v704
    %1626 = vmatprep.subr.mxu0 %v713
    %1627 = vmatpush1.msra.mxu0 %v712
    %1628 = vmatprep.subr.mxu0 %v721
    %1629 = vmatpush1.msra.mxu0 %v720
    %1630 = vmatprep.subr.mxu0 %v729
    %1631 = vmatpush1.msra.mxu0 %v728
    %1632 = vmatprep.subr.mxu0 %v737
    %1633 = vmatpush1.msra.mxu0 %v736
    %1634 = vmatprep.subr.mxu0 %v745
    %1635 = vmatpush1.msra.mxu0 %v744
    %1636 = vmatprep.subr.mxu0 %v753
    %1637 = vmatpush1.msra.mxu0 %v752
    %1638 = vmatprep.subr.mxu0 %v761
    %1639 = vmatpush1.msra.mxu0 %v760
    %1640 = vmatprep.subr.mxu0 %v769
    %1641 = vmatpush1.msra.mxu0 %v768
    %1642 = vmatprep.subr.mxu0 %v777
    %1643 = vmatpush1.msra.mxu0 %v776
    %1644 = vmatprep.subr.mxu0 %v785
    %1645 = vmatpush1.msra.mxu0 %v784
    %1646 = vmatprep.subr.mxu0 %v793
    %1647 = vmatpush1.msra.mxu0 %v792
    %1648 = vmatprep.subr.mxu0 %v801
    %1649 = vmatpush1.msra.mxu0 %v800
    %1650 = vmatprep.subr.mxu0 %v809
    %1651 = vmatpush1.msra.mxu0 %v808
    %1652 = vmatprep.subr.mxu0 %v817
    %1653 = vmatpush1.msra.mxu0 %v816
    %1654 = vmatprep.mubr.f32.mxu0 %v1154
    %1655 = vmatmul.mubr.f32.gmra.mrb[0].mxu0 %v1146
    %v1656 = vpop.f32.mrb[0].mxu0
    %v1657 = vadd.f32 %v1586, %v1656
    %v1658 = vpop.f32.mrb[0].mxu0
    %v1659 = vadd.f32 %v1588, %v1658
    %1660 = vdwg.mxu0
    %1661 = vmatprep.subr.mxu0 %v825
    %1662 = vmatpush1.msra.mxu0 %v824
    %1663 = vmatprep.subr.mxu0 %v833
    %1664 = vmatpush1.msra.mxu0 %v832
    %1665 = vmatprep.subr.mxu0 %v841
    %1666 = vmatpush1.msra.mxu0 %v840
    %1667 = vmatprep.subr.mxu0 %v849
    %1668 = vmatpush1.msra.mxu0 %v848
    %1669 = vmatprep.subr.mxu0 %v857
    %1670 = vmatpush1.msra.mxu0 %v856
    %1671 = vmatprep.subr.mxu0 %v865
    %1672 = vmatpush1.msra.mxu0 %v864
    %1673 = vmatprep.subr.mxu0 %v873
    %1674 = vmatpush1.msra.mxu0 %v872
    %1675 = vmatprep.subr.mxu0 %v881
    %1676 = vmatpush1.msra.mxu0 %v880
    %1677 = vmatprep.subr.mxu0 %v889
    %1678 = vmatpush1.msra.mxu0 %v888
    %1679 = vmatprep.subr.mxu0 %v897
    %1680 = vmatpush1.msra.mxu0 %v896
    %1681 = vmatprep.subr.mxu0 %v905
    %1682 = vmatpush1.msra.mxu0 %v904
    %1683 = vmatprep.subr.mxu0 %v913
    %1684 = vmatpush1.msra.mxu0 %v912
    %1685 = vmatprep.subr.mxu0 %v921
    %1686 = vmatpush1.msra.mxu0 %v920
    %1687 = vmatprep.subr.mxu0 %v929
    %1688 = vmatpush1.msra.mxu0 %v928
    %1689 = vmatprep.subr.mxu0 %v937
    %1690 = vmatpush1.msra.mxu0 %v936
    %1691 = vmatprep.subr.mxu0 %v945
    %1692 = vmatpush1.msra.mxu0 %v944
    %1693 = vmatprep.subr.mxu0 %v953
    %1694 = vmatpush1.msra.mxu0 %v952
    %1695 = vmatprep.subr.mxu0 %v961
    %1696 = vmatpush1.msra.mxu0 %v960
    %1697 = vmatprep.subr.mxu0 %v969
    %1698 = vmatpush1.msra.mxu0 %v968
    %1699 = vmatprep.subr.mxu0 %v977
    %1700 = vmatpush1.msra.mxu0 %v976
    %1701 = vmatprep.subr.mxu0 %v985
    %1702 = vmatpush1.msra.mxu0 %v984
    %1703 = vmatprep.subr.mxu0 %v993
    %1704 = vmatpush1.msra.mxu0 %v992
    %1705 = vmatprep.subr.mxu0 %v1001
    %1706 = vmatpush1.msra.mxu0 %v1000
    %1707 = vmatprep.subr.mxu0 %v1009
    %1708 = vmatpush1.msra.mxu0 %v1008
    %1709 = vmatprep.subr.mxu0 %v1017
    %1710 = vmatpush1.msra.mxu0 %v1016
    %1711 = vmatprep.subr.mxu0 %v1025
    %1712 = vmatpush1.msra.mxu0 %v1024
    %1713 = vmatprep.subr.mxu0 %v1033
    %1714 = vmatpush1.msra.mxu0 %v1032
    %1715 = vmatprep.subr.mxu0 %v1041
    %1716 = vmatpush1.msra.mxu0 %v1040
    %1717 = vmatprep.subr.mxu0 %v1049
    %1718 = vmatpush1.msra.mxu0 %v1048
    %1719 = vmatprep.subr.mxu0 %v1057
    %1720 = vmatpush1.msra.mxu0 %v1056
    %1721 = vmatprep.subr.mxu0 %v1065
    %1722 = vmatpush1.msra.mxu0 %v1064
    %1723 = vmatprep.subr.mxu0 %v1073
    %1724 = vmatpush1.msra.mxu0 %v1072
    %1725 = vmatprep.mubr.f32.mxu0 %v1155
    %1726 = vmatmul.mubr.f32.gmra.mrb[0].mxu0 %v1153
    %v1727 = vpop.f32.mrb[0].mxu0
    %v1728 = vadd.f32 %v1657, %v1727
    %v1729 = vpop.f32.mrb[0].mxu0
    %v1730 = vadd.f32 %v1659, %v1729
    %1731 = vdwg.mxu0
    %1732 = vmatprep.subr.mxu0 %v59
    %1733 = vmatpush1.msra.mxu0 %v58
    %1734 = vmatprep.subr.mxu0 %v67
    %1735 = vmatpush1.msra.mxu0 %v66
    %1736 = vmatprep.subr.mxu0 %v75
    %1737 = vmatpush1.msra.mxu0 %v74
    %1738 = vmatprep.subr.mxu0 %v83
    %1739 = vmatpush1.msra.mxu0 %v82
    %1740 = vmatprep.subr.mxu0 %v91
    %1741 = vmatpush1.msra.mxu0 %v90
    %1742 = vmatprep.subr.mxu0 %v99
    %1743 = vmatpush1.msra.mxu0 %v98
    %1744 = vmatprep.subr.mxu0 %v107
    %1745 = vmatpush1.msra.mxu0 %v106
    %1746 = vmatprep.subr.mxu0 %v115
    %1747 = vmatpush1.msra.mxu0 %v114
    %1748 = vmatprep.subr.mxu0 %v123
    %1749 = vmatpush1.msra.mxu0 %v122
    %1750 = vmatprep.subr.mxu0 %v131
    %1751 = vmatpush1.msra.mxu0 %v130
    %1752 = vmatprep.subr.mxu0 %v139
    %1753 = vmatpush1.msra.mxu0 %v138
    %1754 = vmatprep.subr.mxu0 %v147
    %1755 = vmatpush1.msra.mxu0 %v146
    %1756 = vmatprep.subr.mxu0 %v155
    %1757 = vmatpush1.msra.mxu0 %v154
    %1758 = vmatprep.subr.mxu0 %v163
    %1759 = vmatpush1.msra.mxu0 %v162
    %1760 = vmatprep.subr.mxu0 %v171
    %1761 = vmatpush1.msra.mxu0 %v170
    %1762 = vmatprep.subr.mxu0 %v179
    %1763 = vmatpush1.msra.mxu0 %v178
    %1764 = vmatprep.subr.mxu0 %v187
    %1765 = vmatpush1.msra.mxu0 %v186
    %1766 = vmatprep.subr.mxu0 %v195
    %1767 = vmatpush1.msra.mxu0 %v194
    %1768 = vmatprep.subr.mxu0 %v203
    %1769 = vmatpush1.msra.mxu0 %v202
    %1770 = vmatprep.subr.mxu0 %v211
    %1771 = vmatpush1.msra.mxu0 %v210
    %1772 = vmatprep.subr.mxu0 %v219
    %1773 = vmatpush1.msra.mxu0 %v218
    %1774 = vmatprep.subr.mxu0 %v227
    %1775 = vmatpush1.msra.mxu0 %v226
    %1776 = vmatprep.subr.mxu0 %v235
    %1777 = vmatpush1.msra.mxu0 %v234
    %1778 = vmatprep.subr.mxu0 %v243
    %1779 = vmatpush1.msra.mxu0 %v242
    %1780 = vmatprep.subr.mxu0 %v251
    %1781 = vmatpush1.msra.mxu0 %v250
    %1782 = vmatprep.subr.mxu0 %v259
    %1783 = vmatpush1.msra.mxu0 %v258
    %1784 = vmatprep.subr.mxu0 %v267
    %1785 = vmatpush1.msra.mxu0 %v266
    %1786 = vmatprep.subr.mxu0 %v275
    %1787 = vmatpush1.msra.mxu0 %v274
    %1788 = vmatprep.subr.mxu0 %v283
    %1789 = vmatpush1.msra.mxu0 %v282
    %1790 = vmatprep.subr.mxu0 %v291
    %1791 = vmatpush1.msra.mxu0 %v290
    %1792 = vmatprep.subr.mxu0 %v299
    %1793 = vmatpush1.msra.mxu0 %v298
    %1794 = vmatprep.subr.mxu0 %v307
    %1795 = vmatpush1.msra.mxu0 %v306
    %1796 = vmatprep.mubr.f32.mxu0 %v1137
    %1797 = vmatmul.mubr.f32.gmra.mrb[0].mxu0 %v1129
    %v1798 = vpop.f32.mrb[0].mxu0
    %v1799 = vadd.f32 %v1099, %v1798
    %v1800 = vpop.f32.mrb[0].mxu0
    %v1801 = vadd.f32 %v1103, %v1800
    %1802 = vdwg.mxu0
    %1803 = vmatprep.subr.mxu0 %v315
    %1804 = vmatpush1.msra.mxu0 %v314
    %1805 = vmatprep.subr.mxu0 %v323
    %1806 = vmatpush1.msra.mxu0 %v322
    %1807 = vmatprep.subr.mxu0 %v331
    %1808 = vmatpush1.msra.mxu0 %v330
    %1809 = vmatprep.subr.mxu0 %v339
    %1810 = vmatpush1.msra.mxu0 %v338
    %1811 = vmatprep.subr.mxu0 %v347
    %1812 = vmatpush1.msra.mxu0 %v346
    %1813 = vmatprep.subr.mxu0 %v355
    %1814 = vmatpush1.msra.mxu0 %v354
    %1815 = vmatprep.subr.mxu0 %v363
    %1816 = vmatpush1.msra.mxu0 %v362
    %1817 = vmatprep.subr.mxu0 %v371
    %1818 = vmatpush1.msra.mxu0 %v370
    %1819 = vmatprep.subr.mxu0 %v379
    %1820 = vmatpush1.msra.mxu0 %v378
    %1821 = vmatprep.subr.mxu0 %v387
    %1822 = vmatpush1.msra.mxu0 %v386
    %1823 = vmatprep.subr.mxu0 %v395
    %1824 = vmatpush1.msra.mxu0 %v394
    %1825 = vmatprep.subr.mxu0 %v403
    %1826 = vmatpush1.msra.mxu0 %v402
    %1827 = vmatprep.subr.mxu0 %v411
    %1828 = vmatpush1.msra.mxu0 %v410
    %1829 = vmatprep.subr.mxu0 %v419
    %1830 = vmatpush1.msra.mxu0 %v418
    %1831 = vmatprep.subr.mxu0 %v427
    %1832 = vmatpush1.msra.mxu0 %v426
    %1833 = vmatprep.subr.mxu0 %v435
    %1834 = vmatpush1.msra.mxu0 %v434
    %1835 = vmatprep.subr.mxu0 %v443
    %1836 = vmatpush1.msra.mxu0 %v442
    %1837 = vmatprep.subr.mxu0 %v451
    %1838 = vmatpush1.msra.mxu0 %v450
    %1839 = vmatprep.subr.mxu0 %v459
    %1840 = vmatpush1.msra.mxu0 %v458
    %1841 = vmatprep.subr.mxu0 %v467
    %1842 = vmatpush1.msra.mxu0 %v466
    %1843 = vmatprep.subr.mxu0 %v475
    %1844 = vmatpush1.msra.mxu0 %v474
    %1845 = vmatprep.subr.mxu0 %v483
    %1846 = vmatpush1.msra.mxu0 %v482
    %1847 = vmatprep.subr.mxu0 %v491
    %1848 = vmatpush1.msra.mxu0 %v490
    %1849 = vmatprep.subr.mxu0 %v499
    %1850 = vmatpush1.msra.mxu0 %v498
    %1851 = vmatprep.subr.mxu0 %v507
    %1852 = vmatpush1.msra.mxu0 %v506
    %1853 = vmatprep.subr.mxu0 %v515
    %1854 = vmatpush1.msra.mxu0 %v514
    %1855 = vmatprep.subr.mxu0 %v523
    %1856 = vmatpush1.msra.mxu0 %v522
    %1857 = vmatprep.subr.mxu0 %v531
    %1858 = vmatpush1.msra.mxu0 %v530
    %1859 = vmatprep.subr.mxu0 %v539
    %1860 = vmatpush1.msra.mxu0 %v538
    %1861 = vmatprep.subr.mxu0 %v547
    %1862 = vmatpush1.msra.mxu0 %v546
    %1863 = vmatprep.subr.mxu0 %v555
    %1864 = vmatpush1.msra.mxu0 %v554
    %1865 = vmatprep.subr.mxu0 %v563
    %1866 = vmatpush1.msra.mxu0 %v562
    %1867 = vmatprep.mubr.f32.mxu0 %v1138
    %1868 = vmatmul.mubr.f32.gmra.mrb[0].mxu0 %v1136
    %v1869 = vpop.f32.mrb[0].mxu0
    %v1870 = vadd.f32 %v1799, %v1869
    %v1871 = vpop.f32.mrb[0].mxu0
    %v1872 = vadd.f32 %v1801, %v1871
    %1873 = vdwg.mxu0
    %1874 = vmatprep.subr.mxu0 %v571
    %1875 = vmatpush1.msra.mxu0 %v570
    %1876 = vmatprep.subr.mxu0 %v579
    %1877 = vmatpush1.msra.mxu0 %v578
    %1878 = vmatprep.subr.mxu0 %v587
    %1879 = vmatpush1.msra.mxu0 %v586
    %1880 = vmatprep.subr.mxu0 %v595
    %1881 = vmatpush1.msra.mxu0 %v594
    %1882 = vmatprep.subr.mxu0 %v603
    %1883 = vmatpush1.msra.mxu0 %v602
    %1884 = vmatprep.subr.mxu0 %v611
    %1885 = vmatpush1.msra.mxu0 %v610
    %1886 = vmatprep.subr.mxu0 %v619
    %1887 = vmatpush1.msra.mxu0 %v618
    %1888 = vmatprep.subr.mxu0 %v627
    %1889 = vmatpush1.msra.mxu0 %v626
    %1890 = vmatprep.subr.mxu0 %v635
    %1891 = vmatpush1.msra.mxu0 %v634
    %1892 = vmatprep.subr.mxu0 %v643
    %1893 = vmatpush1.msra.mxu0 %v642
    %1894 = vmatprep.subr.mxu0 %v651
    %1895 = vmatpush1.msra.mxu0 %v650
    %1896 = vmatprep.subr.mxu0 %v659
    %1897 = vmatpush1.msra.mxu0 %v658
    %1898 = vmatprep.subr.mxu0 %v667
    %1899 = vmatpush1.msra.mxu0 %v666
    %1900 = vmatprep.subr.mxu0 %v675
    %1901 = vmatpush1.msra.mxu0 %v674
    %1902 = vmatprep.subr.mxu0 %v683
    %1903 = vmatpush1.msra.mxu0 %v682
    %1904 = vmatprep.subr.mxu0 %v691
    %1905 = vmatpush1.msra.mxu0 %v690
    %1906 = vmatprep.subr.mxu0 %v699
    %1907 = vmatpush1.msra.mxu0 %v698
    %1908 = vmatprep.subr.mxu0 %v707
    %1909 = vmatpush1.msra.mxu0 %v706
    %1910 = vmatprep.subr.mxu0 %v715
    %1911 = vmatpush1.msra.mxu0 %v714
    %1912 = vmatprep.subr.mxu0 %v723
    %1913 = vmatpush1.msra.mxu0 %v722
    %1914 = vmatprep.subr.mxu0 %v731
    %1915 = vmatpush1.msra.mxu0 %v730
    %1916 = vmatprep.subr.mxu0 %v739
    %1917 = vmatpush1.msra.mxu0 %v738
    %1918 = vmatprep.subr.mxu0 %v747
    %1919 = vmatpush1.msra.mxu0 %v746
    %1920 = vmatprep.subr.mxu0 %v755
    %1921 = vmatpush1.msra.mxu0 %v754
    %1922 = vmatprep.subr.mxu0 %v763
    %1923 = vmatpush1.msra.mxu0 %v762
    %1924 = vmatprep.subr.mxu0 %v771
    %1925 = vmatpush1.msra.mxu0 %v770
    %1926 = vmatprep.subr.mxu0 %v779
    %1927 = vmatpush1.msra.mxu0 %v778
    %1928 = vmatprep.subr.mxu0 %v787
    %1929 = vmatpush1.msra.mxu0 %v786
    %1930 = vmatprep.subr.mxu0 %v795
    %1931 = vmatpush1.msra.mxu0 %v794
    %1932 = vmatprep.subr.mxu0 %v803
    %1933 = vmatpush1.msra.mxu0 %v802
    %1934 = vmatprep.subr.mxu0 %v811
    %1935 = vmatpush1.msra.mxu0 %v810
    %1936 = vmatprep.subr.mxu0 %v819
    %1937 = vmatpush1.msra.mxu0 %v818
    %1938 = vmatprep.mubr.f32.mxu0 %v1154
    %1939 = vmatmul.mubr.f32.gmra.mrb[0].mxu0 %v1146
    %v1940 = vpop.f32.mrb[0].mxu0
    %v1941 = vadd.f32 %v1870, %v1940
    %v1942 = vpop.f32.mrb[0].mxu0
    %v1943 = vadd.f32 %v1872, %v1942
    %1944 = vdwg.mxu0
    %1945 = vmatprep.subr.mxu0 %v827
    %1946 = vmatpush1.msra.mxu0 %v826
    %1947 = vmatprep.subr.mxu0 %v835
    %1948 = vmatpush1.msra.mxu0 %v834
    %1949 = vmatprep.subr.mxu0 %v843
    %1950 = vmatpush1.msra.mxu0 %v842
    %1951 = vmatprep.subr.mxu0 %v851
    %1952 = vmatpush1.msra.mxu0 %v850
    %1953 = vmatprep.subr.mxu0 %v859
    %1954 = vmatpush1.msra.mxu0 %v858
    %1955 = vmatprep.subr.mxu0 %v867
    %1956 = vmatpush1.msra.mxu0 %v866
    %1957 = vmatprep.subr.mxu0 %v875
    %1958 = vmatpush1.msra.mxu0 %v874
    %1959 = vmatprep.subr.mxu0 %v883
    %1960 = vmatpush1.msra.mxu0 %v882
    %1961 = vmatprep.subr.mxu0 %v891
    %1962 = vmatpush1.msra.mxu0 %v890
    %1963 = vmatprep.subr.mxu0 %v899
    %1964 = vmatpush1.msra.mxu0 %v898
    %1965 = vmatprep.subr.mxu0 %v907
    %1966 = vmatpush1.msra.mxu0 %v906
    %1967 = vmatprep.subr.mxu0 %v915
    %1968 = vmatpush1.msra.mxu0 %v914
    %1969 = vmatprep.subr.mxu0 %v923
    %1970 = vmatpush1.msra.mxu0 %v922
    %1971 = vmatprep.subr.mxu0 %v931
    %1972 = vmatpush1.msra.mxu0 %v930
    %1973 = vmatprep.subr.mxu0 %v939
    %1974 = vmatpush1.msra.mxu0 %v938
    %1975 = vmatprep.subr.mxu0 %v947
    %1976 = vmatpush1.msra.mxu0 %v946
    %1977 = vmatprep.subr.mxu0 %v955
    %1978 = vmatpush1.msra.mxu0 %v954
    %1979 = vmatprep.subr.mxu0 %v963
    %1980 = vmatpush1.msra.mxu0 %v962
    %1981 = vmatprep.subr.mxu0 %v971
    %1982 = vmatpush1.msra.mxu0 %v970
    %1983 = vmatprep.subr.mxu0 %v979
    %1984 = vmatpush1.msra.mxu0 %v978
    %1985 = vmatprep.subr.mxu0 %v987
    %1986 = vmatpush1.msra.mxu0 %v986
    %1987 = vmatprep.subr.mxu0 %v995
    %1988 = vmatpush1.msra.mxu0 %v994
    %1989 = vmatprep.subr.mxu0 %v1003
    %1990 = vmatpush1.msra.mxu0 %v1002
    %1991 = vmatprep.subr.mxu0 %v1011
    %1992 = vmatpush1.msra.mxu0 %v1010
    %1993 = vmatprep.subr.mxu0 %v1019
    %1994 = vmatpush1.msra.mxu0 %v1018
    %1995 = vmatprep.subr.mxu0 %v1027
    %1996 = vmatpush1.msra.mxu0 %v1026
    %1997 = vmatprep.subr.mxu0 %v1035
    %1998 = vmatpush1.msra.mxu0 %v1034
    %1999 = vmatprep.subr.mxu0 %v1043
    %2000 = vmatpush1.msra.mxu0 %v1042
    %2001 = vmatprep.subr.mxu0 %v1051
    %2002 = vmatpush1.msra.mxu0 %v1050
    %2003 = vmatprep.subr.mxu0 %v1059
    %2004 = vmatpush1.msra.mxu0 %v1058
    %2005 = vmatprep.subr.mxu0 %v1067
    %2006 = vmatpush1.msra.mxu0 %v1066
    %2007 = vmatprep.subr.mxu0 %v1075
    %2008 = vmatpush1.msra.mxu0 %v1074
    %2009 = vmatprep.mubr.f32.mxu0 %v1155
    %2010 = vmatmul.mubr.f32.gmra.mrb[0].mxu0 %v1153
    %v2011 = vpop.f32.mrb[0].mxu0
    %v2012 = vadd.f32 %v1941, %v2011
    %v2013 = vpop.f32.mrb[0].mxu0
    %v2014 = vadd.f32 %v1943, %v2013
    %2015 = vdwg.mxu0
    %2016 = vmatprep.subr.mxu0 %v61
    %2017 = vmatpush1.msra.mxu0 %v60
    %2018 = vmatprep.subr.mxu0 %v69
    %2019 = vmatpush1.msra.mxu0 %v68
    %2020 = vmatprep.subr.mxu0 %v77
    %2021 = vmatpush1.msra.mxu0 %v76
    %2022 = vmatprep.subr.mxu0 %v85
    %2023 = vmatpush1.msra.mxu0 %v84
    %2024 = vmatprep.subr.mxu0 %v93
    %2025 = vmatpush1.msra.mxu0 %v92
    %2026 = vmatprep.subr.mxu0 %v101
    %2027 = vmatpush1.msra.mxu0 %v100
    %2028 = vmatprep.subr.mxu0 %v109
    %2029 = vmatpush1.msra.mxu0 %v108
    %2030 = vmatprep.subr.mxu0 %v117
    %2031 = vmatpush1.msra.mxu0 %v116
    %2032 = vmatprep.subr.mxu0 %v125
    %2033 = vmatpush1.msra.mxu0 %v124
    %2034 = vmatprep.subr.mxu0 %v133
    %2035 = vmatpush1.msra.mxu0 %v132
    %2036 = vmatprep.subr.mxu0 %v141
    %2037 = vmatpush1.msra.mxu0 %v140
    %2038 = vmatprep.subr.mxu0 %v149
    %2039 = vmatpush1.msra.mxu0 %v148
    %2040 = vmatprep.subr.mxu0 %v157
    %2041 = vmatpush1.msra.mxu0 %v156
    %2042 = vmatprep.subr.mxu0 %v165
    %2043 = vmatpush1.msra.mxu0 %v164
    %2044 = vmatprep.subr.mxu0 %v173
    %2045 = vmatpush1.msra.mxu0 %v172
    %2046 = vmatprep.subr.mxu0 %v181
    %2047 = vmatpush1.msra.mxu0 %v180
    %2048 = vmatprep.subr.mxu0 %v189
    %2049 = vmatpush1.msra.mxu0 %v188
    %2050 = vmatprep.subr.mxu0 %v197
    %2051 = vmatpush1.msra.mxu0 %v196
    %2052 = vmatprep.subr.mxu0 %v205
    %2053 = vmatpush1.msra.mxu0 %v204
    %2054 = vmatprep.subr.mxu0 %v213
    %2055 = vmatpush1.msra.mxu0 %v212
    %2056 = vmatprep.subr.mxu0 %v221
    %2057 = vmatpush1.msra.mxu0 %v220
    %2058 = vmatprep.subr.mxu0 %v229
    %2059 = vmatpush1.msra.mxu0 %v228
    %2060 = vmatprep.subr.mxu0 %v237
    %2061 = vmatpush1.msra.mxu0 %v236
    %2062 = vmatprep.subr.mxu0 %v245
    %2063 = vmatpush1.msra.mxu0 %v244
    %2064 = vmatprep.subr.mxu0 %v253
    %2065 = vmatpush1.msra.mxu0 %v252
    %2066 = vmatprep.subr.mxu0 %v261
    %2067 = vmatpush1.msra.mxu0 %v260
    %2068 = vmatprep.subr.mxu0 %v269
    %2069 = vmatpush1.msra.mxu0 %v268
    %2070 = vmatprep.subr.mxu0 %v277
    %2071 = vmatpush1.msra.mxu0 %v276
    %2072 = vmatprep.subr.mxu0 %v285
    %2073 = vmatpush1.msra.mxu0 %v284
    %2074 = vmatprep.subr.mxu0 %v293
    %2075 = vmatpush1.msra.mxu0 %v292
    %2076 = vmatprep.subr.mxu0 %v301
    %2077 = vmatpush1.msra.mxu0 %v300
    %2078 = vmatprep.subr.mxu0 %v309
    %2079 = vmatpush1.msra.mxu0 %v308
    %2080 = vmatprep.mubr.f32.mxu0 %v1137
    %2081 = vmatmul.mubr.f32.gmra.mrb[0].mxu0 %v1129
    %v2082 = vpop.f32.mrb[0].mxu0
    %v2083 = vadd.f32 %v1107, %v2082
    %v2084 = vpop.f32.mrb[0].mxu0
    %v2085 = vadd.f32 %v1111, %v2084
    %2086 = vdwg.mxu0
    %2087 = vmatprep.subr.mxu0 %v317
    %2088 = vmatpush1.msra.mxu0 %v316
    %2089 = vmatprep.subr.mxu0 %v325
    %2090 = vmatpush1.msra.mxu0 %v324
    %2091 = vmatprep.subr.mxu0 %v333
    %2092 = vmatpush1.msra.mxu0 %v332
    %2093 = vmatprep.subr.mxu0 %v341
    %2094 = vmatpush1.msra.mxu0 %v340
    %2095 = vmatprep.subr.mxu0 %v349
    %2096 = vmatpush1.msra.mxu0 %v348
    %2097 = vmatprep.subr.mxu0 %v357
    %2098 = vmatpush1.msra.mxu0 %v356
    %2099 = vmatprep.subr.mxu0 %v365
    %2100 = vmatpush1.msra.mxu0 %v364
    %2101 = vmatprep.subr.mxu0 %v373
    %2102 = vmatpush1.msra.mxu0 %v372
    %2103 = vmatprep.subr.mxu0 %v381
    %2104 = vmatpush1.msra.mxu0 %v380
    %2105 = vmatprep.subr.mxu0 %v389
    %2106 = vmatpush1.msra.mxu0 %v388
    %2107 = vmatprep.subr.mxu0 %v397
    %2108 = vmatpush1.msra.mxu0 %v396
    %2109 = vmatprep.subr.mxu0 %v405
    %2110 = vmatpush1.msra.mxu0 %v404
    %2111 = vmatprep.subr.mxu0 %v413
    %2112 = vmatpush1.msra.mxu0 %v412
    %2113 = vmatprep.subr.mxu0 %v421
    %2114 = vmatpush1.msra.mxu0 %v420
    %2115 = vmatprep.subr.mxu0 %v429
    %2116 = vmatpush1.msra.mxu0 %v428
    %2117 = vmatprep.subr.mxu0 %v437
    %2118 = vmatpush1.msra.mxu0 %v436
    %2119 = vmatprep.subr.mxu0 %v445
    %2120 = vmatpush1.msra.mxu0 %v444
    %2121 = vmatprep.subr.mxu0 %v453
    %2122 = vmatpush1.msra.mxu0 %v452
    %2123 = vmatprep.subr.mxu0 %v461
    %2124 = vmatpush1.msra.mxu0 %v460
    %2125 = vmatprep.subr.mxu0 %v469
    %2126 = vmatpush1.msra.mxu0 %v468
    %2127 = vmatprep.subr.mxu0 %v477
    %2128 = vmatpush1.msra.mxu0 %v476
    %2129 = vmatprep.subr.mxu0 %v485
    %2130 = vmatpush1.msra.mxu0 %v484
    %2131 = vmatprep.subr.mxu0 %v493
    %2132 = vmatpush1.msra.mxu0 %v492
    %2133 = vmatprep.subr.mxu0 %v501
    %2134 = vmatpush1.msra.mxu0 %v500
    %2135 = vmatprep.subr.mxu0 %v509
    %2136 = vmatpush1.msra.mxu0 %v508
    %2137 = vmatprep.subr.mxu0 %v517
    %2138 = vmatpush1.msra.mxu0 %v516
    %2139 = vmatprep.subr.mxu0 %v525
    %2140 = vmatpush1.msra.mxu0 %v524
    %2141 = vmatprep.subr.mxu0 %v533
    %2142 = vmatpush1.msra.mxu0 %v532
    %2143 = vmatprep.subr.mxu0 %v541
    %2144 = vmatpush1.msra.mxu0 %v540
    %2145 = vmatprep.subr.mxu0 %v549
    %2146 = vmatpush1.msra.mxu0 %v548
    %2147 = vmatprep.subr.mxu0 %v557
    %2148 = vmatpush1.msra.mxu0 %v556
    %2149 = vmatprep.subr.mxu0 %v565
    %2150 = vmatpush1.msra.mxu0 %v564
    %2151 = vmatprep.mubr.f32.mxu0 %v1138
    %2152 = vmatmul.mubr.f32.gmra.mrb[0].mxu0 %v1136
    %v2153 = vpop.f32.mrb[0].mxu0
    %v2154 = vadd.f32 %v2083, %v2153
    %v2155 = vpop.f32.mrb[0].mxu0
    %v2156 = vadd.f32 %v2085, %v2155
    %2157 = vdwg.mxu0
    %2158 = vmatprep.subr.mxu0 %v573
    %2159 = vmatpush1.msra.mxu0 %v572
    %2160 = vmatprep.subr.mxu0 %v581
    %2161 = vmatpush1.msra.mxu0 %v580
    %2162 = vmatprep.subr.mxu0 %v589
    %2163 = vmatpush1.msra.mxu0 %v588
    %2164 = vmatprep.subr.mxu0 %v597
    %2165 = vmatpush1.msra.mxu0 %v596
    %2166 = vmatprep.subr.mxu0 %v605
    %2167 = vmatpush1.msra.mxu0 %v604
    %2168 = vmatprep.subr.mxu0 %v613
    %2169 = vmatpush1.msra.mxu0 %v612
    %2170 = vmatprep.subr.mxu0 %v621
    %2171 = vmatpush1.msra.mxu0 %v620
    %2172 = vmatprep.subr.mxu0 %v629
    %2173 = vmatpush1.msra.mxu0 %v628
    %2174 = vmatprep.subr.mxu0 %v637
    %2175 = vmatpush1.msra.mxu0 %v636
    %2176 = vmatprep.subr.mxu0 %v645
    %2177 = vmatpush1.msra.mxu0 %v644
    %2178 = vmatprep.subr.mxu0 %v653
    %2179 = vmatpush1.msra.mxu0 %v652
    %2180 = vmatprep.subr.mxu0 %v661
    %2181 = vmatpush1.msra.mxu0 %v660
    %2182 = vmatprep.subr.mxu0 %v669
    %2183 = vmatpush1.msra.mxu0 %v668
    %2184 = vmatprep.subr.mxu0 %v677
    %2185 = vmatpush1.msra.mxu0 %v676
    %2186 = vmatprep.subr.mxu0 %v685
    %2187 = vmatpush1.msra.mxu0 %v684
    %2188 = vmatprep.subr.mxu0 %v693
    %2189 = vmatpush1.msra.mxu0 %v692
    %2190 = vmatprep.subr.mxu0 %v701
    %2191 = vmatpush1.msra.mxu0 %v700
    %2192 = vmatprep.subr.mxu0 %v709
    %2193 = vmatpush1.msra.mxu0 %v708
    %2194 = vmatprep.subr.mxu0 %v717
    %2195 = vmatpush1.msra.mxu0 %v716
    %2196 = vmatprep.subr.mxu0 %v725
    %2197 = vmatpush1.msra.mxu0 %v724
    %2198 = vmatprep.subr.mxu0 %v733
    %2199 = vmatpush1.msra.mxu0 %v732
    %2200 = vmatprep.subr.mxu0 %v741
    %2201 = vmatpush1.msra.mxu0 %v740
    %2202 = vmatprep.subr.mxu0 %v749
    %2203 = vmatpush1.msra.mxu0 %v748
    %2204 = vmatprep.subr.mxu0 %v757
    %2205 = vmatpush1.msra.mxu0 %v756
    %2206 = vmatprep.subr.mxu0 %v765
    %2207 = vmatpush1.msra.mxu0 %v764
    %2208 = vmatprep.subr.mxu0 %v773
    %2209 = vmatpush1.msra.mxu0 %v772
    %2210 = vmatprep.subr.mxu0 %v781
    %2211 = vmatpush1.msra.mxu0 %v780
    %2212 = vmatprep.subr.mxu0 %v789
    %2213 = vmatpush1.msra.mxu0 %v788
    %2214 = vmatprep.subr.mxu0 %v797
    %2215 = vmatpush1.msra.mxu0 %v796
    %2216 = vmatprep.subr.mxu0 %v805
    %2217 = vmatpush1.msra.mxu0 %v804
    %2218 = vmatprep.subr.mxu0 %v813
    %2219 = vmatpush1.msra.mxu0 %v812
    %2220 = vmatprep.subr.mxu0 %v821
    %2221 = vmatpush1.msra.mxu0 %v820
    %2222 = vmatprep.mubr.f32.mxu0 %v1154
    %2223 = vmatmul.mubr.f32.gmra.mrb[0].mxu0 %v1146
    %v2224 = vpop.f32.mrb[0].mxu0
    %v2225 = vadd.f32 %v2154, %v2224
    %v2226 = vpop.f32.mrb[0].mxu0
    %v2227 = vadd.f32 %v2156, %v2226
    %2228 = vdwg.mxu0
    %2229 = vmatprep.subr.mxu0 %v829
    %2230 = vmatpush1.msra.mxu0 %v828
    %2231 = vmatprep.subr.mxu0 %v837
    %2232 = vmatpush1.msra.mxu0 %v836
    %2233 = vmatprep.subr.mxu0 %v845
    %2234 = vmatpush1.msra.mxu0 %v844
    %2235 = vmatprep.subr.mxu0 %v853
    %2236 = vmatpush1.msra.mxu0 %v852
    %2237 = vmatprep.subr.mxu0 %v861
    %2238 = vmatpush1.msra.mxu0 %v860
    %2239 = vmatprep.subr.mxu0 %v869
    %2240 = vmatpush1.msra.mxu0 %v868
    %2241 = vmatprep.subr.mxu0 %v877
    %2242 = vmatpush1.msra.mxu0 %v876
    %2243 = vmatprep.subr.mxu0 %v885
    %2244 = vmatpush1.msra.mxu0 %v884
    %2245 = vmatprep.subr.mxu0 %v893
    %2246 = vmatpush1.msra.mxu0 %v892
    %2247 = vmatprep.subr.mxu0 %v901
    %2248 = vmatpush1.msra.mxu0 %v900
    %2249 = vmatprep.subr.mxu0 %v909
    %2250 = vmatpush1.msra.mxu0 %v908
    %2251 = vmatprep.subr.mxu0 %v917
    %2252 = vmatpush1.msra.mxu0 %v916
    %2253 = vmatprep.subr.mxu0 %v925
    %2254 = vmatpush1.msra.mxu0 %v924
    %2255 = vmatprep.subr.mxu0 %v933
    %2256 = vmatpush1.msra.mxu0 %v932
    %2257 = vmatprep.subr.mxu0 %v941
    %2258 = vmatpush1.msra.mxu0 %v940
    %2259 = vmatprep.subr.mxu0 %v949
    %2260 = vmatpush1.msra.mxu0 %v948
    %2261 = vmatprep.subr.mxu0 %v957
    %2262 = vmatpush1.msra.mxu0 %v956
    %2263 = vmatprep.subr.mxu0 %v965
    %2264 = vmatpush1.msra.mxu0 %v964
    %2265 = vmatprep.subr.mxu0 %v973
    %2266 = vmatpush1.msra.mxu0 %v972
    %2267 = vmatprep.subr.mxu0 %v981
    %2268 = vmatpush1.msra.mxu0 %v980
    %2269 = vmatprep.subr.mxu0 %v989
    %2270 = vmatpush1.msra.mxu0 %v988
    %2271 = vmatprep.subr.mxu0 %v997
    %2272 = vmatpush1.msra.mxu0 %v996
    %2273 = vmatprep.subr.mxu0 %v1005
    %2274 = vmatpush1.msra.mxu0 %v1004
    %2275 = vmatprep.subr.mxu0 %v1013
    %2276 = vmatpush1.msra.mxu0 %v1012
    %2277 = vmatprep.subr.mxu0 %v1021
    %2278 = vmatpush1.msra.mxu0 %v1020
    %2279 = vmatprep.subr.mxu0 %v1029
    %2280 = vmatpush1.msra.mxu0 %v1028
    %2281 = vmatprep.subr.mxu0 %v1037
    %2282 = vmatpush1.msra.mxu0 %v1036
    %2283 = vmatprep.subr.mxu0 %v1045
    %2284 = vmatpush1.msra.mxu0 %v1044
    %2285 = vmatprep.subr.mxu0 %v1053
    %2286 = vmatpush1.msra.mxu0 %v1052
    %2287 = vmatprep.subr.mxu0 %v1061
    %2288 = vmatpush1.msra.mxu0 %v1060
    %2289 = vmatprep.subr.mxu0 %v1069
    %2290 = vmatpush1.msra.mxu0 %v1068
    %2291 = vmatprep.subr.mxu0 %v1077
    %2292 = vmatpush1.msra.mxu0 %v1076
    %2293 = vmatprep.mubr.f32.mxu0 %v1155
    %2294 = vmatmul.mubr.f32.gmra.mrb[0].mxu0 %v1153
    %v2295 = vpop.f32.mrb[0].mxu0
    %v2296 = vadd.f32 %v2225, %v2295
    %v2297 = vpop.f32.mrb[0].mxu0
    %v2298 = vadd.f32 %v2227, %v2297
    %2299 = vdwg.mxu0
    %v2308 = vcombine.low %v1444, %v1446
    %v2309 = vcombine.low %v1728, %v1730
    %v2311 = vunpack.c.l.s4 1983009808
    %v2312 = vunpack.c.0.s8 %v2311
    %v2313 = vlaneseq
    %v2314 = vshrl.u32 %v2313, 7
    %v2315 = vsub.s32 %v2312, %v2314
    %v2316 = vrot.slane %v2308, %v2315
    %v2318 = vunpack.c.l.s4 1983009808
    %v2319 = vunpack.c.0.s8 %v2318
    %v2320 = vlaneseq
    %v2321 = vshrl.u32 %v2320, 7
    %v2322 = vsub.s32 %v2319, %v2321
    %v2323 = vrot.slane %v2309, %v2322
    %v2324 = vcombine.low %v2316, %v2323
    %v2325 = vcombine.low %v2012, %v2014
    %v2326 = vcombine.low %v2296, %v2298
    %v2328 = vunpack.c.l.s4 1983009808
    %v2329 = vunpack.c.0.s8 %v2328
    %v2330 = vlaneseq
    %v2331 = vshrl.u32 %v2330, 7
    %v2332 = vsub.s32 %v2329, %v2331
    %v2333 = vrot.slane %v2325, %v2332
    %v2335 = vunpack.c.l.s4 1983009808
    %v2336 = vunpack.c.0.s8 %v2335
    %v2337 = vlaneseq
    %v2338 = vshrl.u32 %v2337, 7
    %v2339 = vsub.s32 %v2336, %v2338
    %v2340 = vrot.slane %v2326, %v2339
    %v2341 = vcombine.low %v2333, %v2340
    %2344 = vst [vmem:[#allocation8] sm:$0xff] %v2324
    %2345 = vst [vmem:[#allocation8 + $0x8] sm:$0xff] %v2341
    // Predicated region
    $region26: #{tpu_custom_call.1} parent=1 // pred_check
      _
    $region27: #{tpu_custom_call.1} parent=1 // pred_check_branch
      %2347 = sbr.rel (0) target = $region29
    $region28: #{tpu_custom_call.1} parent=1 // pred_region
      %s2349 = ssub.s32 256, 256
      %2350 = vsyncadd [#allocation4], %s2349
      %s2352 = sshll.u32 [#allocation8], 4
      %s2353 = int_to_ptr.vmem [resolvable:$true] %s2352
      %2355 = dma.vmem_to_hbm [thread:$0]  %s2353, 256, %s3, [#allocation4]
    $region29: #{tpu_custom_call.1} parent=1 // pred_fallthru
      _
    // Predicated region
    $region30: #{tpu_custom_call.1} parent=1 // pred_check
      _
    $region31: #{tpu_custom_call.1} parent=1 // pred_check_branch
      %2357 = sbr.rel (0) target = $region33
    $region32: #{tpu_custom_call.1} parent=1 // pred_region
      %2358 = dma.done [#allocation4], 256
    $region33: #{tpu_custom_call.1} parent=1 // pred_fallthru
      _
    %2359 = vsyncpa [#allocation3], 1
    %2360 = vsyncpa [#allocation6], 1
    %2361 = vsyncpa [#allocation4], 1

</llo_original>
